<compile_context>
chip_gen: v7x
topology: tpu7x:2x2x1
jax: 0.10.0
libtpu: 0.0.40
codegen_flags: <defaults>
</compile_context>

<pallas_src>
import functools

import jax
import jax.numpy as jnp
from jax import lax
from jax.experimental import pallas as pl
from jax.experimental.pallas import tpu as pltpu

_LO = 1e-12   # reference clamp(min=1e-12, ...)
_HI = 1e12    # reference clamp(..., max=1e12)


# --------------------------------------------------------------------------- #
# Fused kernel: fc_out + per-row cross-entropy + CenterLoss rows
# --------------------------------------------------------------------------- #
def _fused_head_center_kernel(x_ref, cen_ref, w_ref, b_ref, lab_ref,
                              ce_ref, inl_ref, outl_ref, *, C, F):
    """One grid step per batch tile; all tensors lane-dense (F on the 128 lanes).

    Per row b of the (TB, F) embedding tile:
      * logits_c = sum_f x_bf * w_cf + b_c                (VPU mul + lane reduce)
      * ce_b     = logsumexp_c(logits) - logits[label_b]
      * CenterLoss clipped mean distances with the clip(0)=LO contribution of the
        masked-out classes folded in algebraically:
            inlier_b  = (S(b,label_b)            + (C-1)*F*LO) / (C*F)
            outlier_b = (sum_c S(b,c) - S(b,lbl) +       F*LO) / (C*F)
        where S(b,c) = sum_f clip((x_bf - centers_cf)^2, LO, HI), which matches
        the reference clamp(dist*mask).mean(1).mean(1) semantics exactly.
    """
    x = x_ref[...]                       # (TB, F) f32
    labels = lab_ref[...]                # (TB, 1) int32

    total_d2 = jnp.zeros_like(x)         # running sum_c clip(d^2)       (VPU add)
    inl_d2 = jnp.zeros_like(x)           # clip(d^2) of the label class  (VPU select)
    logit_cols = []

    # Static unroll over the small class dimension (C = 6); all live tensors 2-D.
    for c in range(C):
        cen_c = cen_ref[c:c + 1, :]                        # (1, F)
        w_c = w_ref[c:c + 1, :]                            # (1, F) lane-dense fc row
        d = x - cen_c
        d2 = jnp.clip(d * d, _LO, _HI)                     # single clip pass
        total_d2 = total_d2 + d2
        inl_d2 = jnp.where(labels == c, d2, inl_d2)
        logit_c = jnp.sum(x * w_c, axis=1, keepdims=True) + b_ref[c:c + 1, :]
        logit_cols.append(logit_c)                         # (TB, 1)

    # ---- cross-entropy over the C logit columns (all (TB, 1) elementwise) ----
    m = logit_cols[0]
    for c in range(1, C):
        m = jnp.maximum(m, logit_cols[c])
    sum_exp = jnp.zeros_like(m)
    picked = jnp.zeros_like(m)
    for c in range(C):
        sum_exp = sum_exp + jnp.exp(logit_cols[c] - m)
        picked = jnp.where(labels == c, logit_cols[c], picked)
    ce_ref[...] = m + jnp.log(sum_exp) - picked

    # ---- CenterLoss finalize: only two lane (XLU) reductions per tile ----
    inl_sum = jnp.sum(inl_d2, axis=1, keepdims=True)       # (TB, 1)
    tot_sum = jnp.sum(total_d2, axis=1, keepdims=True)     # (TB, 1)
    inv = 1.0 / (C * F)
    inl_ref[...] = (inl_sum + (C - 1) * F * _LO) * inv
    outl_ref[...] = (tot_sum - inl_sum + F * _LO) * inv


def _pick_row_tile(B):
    # Single grid step unless the batch is large enough that a 2-way "parallel"
    # split (v7x megacore) beats the ~0.35 us per-step fixed overhead.
    if B >= 1024 and B % 16 == 0:
        return B // 2
    return B


# --------------------------------------------------------------------------- #
# Module forward (post-backbone)
# --------------------------------------------------------------------------- #
def efficientnet_b1_forward(embedding, fc_w, fc_b, centers, section_label,
                            training=True):
    """Fused head of EfficientNet_b1: returns (loss, pred=inlier_dist).

    embedding: (B, 1280) pooled features; fc_w: (C, 1280) (PyTorch Linear layout);
    fc_b: (C,); centers: (C, 1280); section_label: (B,) int.
    """
    # TODO(synk): the pretrained timm efficientnet_b1 backbone
    # (forward_features + global_pool + dropout) is not reimplemented; the Pallas
    # kernel covers the model head starting from the pooled (B, 1280) embedding.
    x = embedding.astype(jnp.float32)                 # cast exactly once
    cen = centers.astype(jnp.float32)                 # (C, F)
    w = fc_w.astype(jnp.float32)                      # (C, F) lane-dense
    b = fc_b.astype(jnp.float32).reshape(-1, 1)       # (C, 1)
    labels2d = section_label.astype(jnp.int32).reshape(-1, 1)

    B, F = x.shape
    C, Fc = cen.shape
    assert F == Fc and w.shape == (C, F)

    TB = _pick_row_tile(B)
    grid = (B // TB,)

    kernel = functools.partial(_fused_head_center_kernel, C=C, F=F)

    ce_rows, inl_rows, outl_rows = pl.pallas_call(
        kernel,
        grid=grid,
        in_specs=[
            pl.BlockSpec((TB, F), lambda bi: (bi, 0)),    # embedding (lane-dense F)
            pl.BlockSpec((C, F), lambda bi: (0, 0)),      # centers
            pl.BlockSpec((C, F), lambda bi: (0, 0)),      # fc weight (C, F)
            pl.BlockSpec((C, 1), lambda bi: (0, 0)),      # fc bias
            pl.BlockSpec((TB, 1), lambda bi: (bi, 0)),    # labels
        ],
        out_specs=(
            pl.BlockSpec((TB, 1), lambda bi: (bi, 0)),    # per-row CE
            pl.BlockSpec((TB, 1), lambda bi: (bi, 0)),    # per-row inlier dist
            pl.BlockSpec((TB, 1), lambda bi: (bi, 0)),    # per-row outlier dist
        ),
        out_shape=(
            jax.ShapeDtypeStruct((B, 1), jnp.float32),
            jax.ShapeDtypeStruct((B, 1), jnp.float32),
            jax.ShapeDtypeStruct((B, 1), jnp.float32),
        ),
        compiler_params=pltpu.CompilerParams(
            dimension_semantics=("parallel",)),
    )(x, cen, w, b, labels2d)

    ce = ce_rows[:, 0]
    inlier = inl_rows[:, 0]
    outlier = outl_rows[:, 0]

    classifier_loss = jnp.mean(ce)                    # nn.CrossEntropyLoss (mean)
    if training:
        center_loss = jnp.mean(inlier) / jnp.mean(outlier)
    else:
        center_loss = jnp.mean(inlier)
    return classifier_loss + center_loss, inlier


if __name__ == "__main__":
    # Module config: n_centers=6, embedding width 1280 (effnet-b1 pooled features).
    B = 16
    n_centers = 6
    num_feature = 1280

    key = jax.random.PRNGKey(0)
    k_e, k_c, k_w, k_b, k_l = jax.random.split(key, 5)

    embedding = jax.random.normal(k_e, (B, num_feature), dtype=jnp.float32)
    centers = jax.random.normal(k_c, (n_centers, num_feature), dtype=jnp.float32)
    # nn.Linear(1280, 6) weight layout: (out_features, in_features) = (6, 1280).
    fc_w = jax.random.normal(k_w, (n_centers, num_feature),
                             dtype=jnp.float32) / jnp.sqrt(float(num_feature))
    fc_b = jax.random.normal(k_b, (n_centers,), dtype=jnp.float32) * 0.01
    labels = jax.random.randint(k_l, (B,), 0, n_centers, dtype=jnp.int32)

    loss, pred = efficientnet_b1_forward(embedding, fc_w, fc_b, centers, labels,
                                         training=True)
    jax.block_until_ready((loss, pred))

    # ------------------ pure-JAX reference ------------------ #
    logits_ref = jnp.einsum("bf,cf->bc", embedding, fc_w,
                            precision=lax.Precision.HIGHEST) + fc_b
    m = jnp.max(logits_ref, axis=1)
    lse = m + jnp.log(jnp.sum(jnp.exp(logits_ref - m[:, None]), axis=1))
    ce_ref = jnp.mean(lse - logits_ref[jnp.arange(B), labels])

    dist = (embedding[:, None, :] - centers[None, :, :]) ** 2
    mask = (labels[:, None] == jnp.arange(n_centers)[None, :]).astype(jnp.float32)
    inl_ref = jnp.clip(dist * mask[:, :, None], 1e-12, 1e12).mean(1).mean(1)
    outl_ref = jnp.clip(dist * (1.0 - mask)[:, :, None], 1e-12, 1e12).mean(1).mean(1)
    center_ref = inl_ref.mean() / outl_ref.mean()
    loss_ref = ce_ref + center_ref

    assert jnp.allclose(pred, inl_ref, rtol=1e-3, atol=1e-5), (pred, inl_ref)
    # Logits are computed exactly in f32 on the VPU (no low-precision MXU pass),
    # so the total loss can be checked tightly against the HIGHEST-precision ref.
    assert jnp.allclose(loss, loss_ref, rtol=1e-3, atol=1e-4), (loss, loss_ref)

    print("KERNEL_OK")
</pallas_src>

<mosaic_0001>
module attributes {stable_mosaic.version = 11 : i64} {
  func.func @_fused_head_center_kernel(%arg0: i32, %arg1: memref<16x1280xf32, #tpu.memory_space<vmem>>, %arg2: memref<6x1280xf32, #tpu.memory_space<vmem>>, %arg3: memref<6x1280xf32, #tpu.memory_space<vmem>>, %arg4: memref<6x1xf32, #tpu.memory_space<vmem>>, %arg5: memref<16x1xi32, #tpu.memory_space<vmem>>, %arg6: memref<16x1xf32, #tpu.memory_space<vmem>>, %arg7: memref<16x1xf32, #tpu.memory_space<vmem>>, %arg8: memref<16x1xf32, #tpu.memory_space<vmem>>) attributes {dimension_semantics = [#tpu.dimension_semantics<parallel>], iteration_bounds = array<i64: 1>, scalar_prefetch = 0 : i64, scratch_operands = 0 : i64, tpu.core_type = #tpu.core_type<tc>, window_params = [{transform_indices = @transform_0, window_bounds = array<i64: 16, 1280>}, {pipeline_mode = #tpu.pipeline_mode<synchronous>, transform_indices = @transform_1, window_bounds = array<i64: 6, 1280>}, {pipeline_mode = #tpu.pipeline_mode<synchronous>, transform_indices = @transform_2, window_bounds = array<i64: 6, 1280>}, {pipeline_mode = #tpu.pipeline_mode<synchronous>, transform_indices = @transform_3, window_bounds = array<i64: 6, 1>}, {transform_indices = @transform_4, window_bounds = array<i64: 16, 1>}, {transform_indices = @transform_5, window_bounds = array<i64: 16, 1>}, {transform_indices = @transform_6, window_bounds = array<i64: 16, 1>}, {transform_indices = @transform_7, window_bounds = array<i64: 16, 1>}]} {
    %c0 = arith.constant 0 : index
    %c0_0 = arith.constant 0 : index
    %0 = vector.load %arg1[%c0, %c0_0] : memref<16x1280xf32, #tpu.memory_space<vmem>>, vector<16x1280xf32>
    %c0_1 = arith.constant 0 : index
    %c0_2 = arith.constant 0 : index
    %1 = vector.load %arg5[%c0_1, %c0_2] : memref<16x1xi32, #tpu.memory_space<vmem>>, vector<16x1xi32>
    %cst = arith.constant 0.000000e+00 : f32
    %2 = vector.broadcast %cst : f32 to vector<16x1280xf32>
    %cst_3 = arith.constant 0.000000e+00 : f32
    %3 = vector.broadcast %cst_3 : f32 to vector<16x1280xf32>
    %c0_4 = arith.constant 0 : index
    %c0_5 = arith.constant 0 : index
    %4 = vector.load %arg2[%c0_4, %c0_5] : memref<6x1280xf32, #tpu.memory_space<vmem>>, vector<1x1280xf32>
    %c0_6 = arith.constant 0 : index
    %c0_7 = arith.constant 0 : index
    %5 = vector.load %arg3[%c0_6, %c0_7] : memref<6x1280xf32, #tpu.memory_space<vmem>>, vector<1x1280xf32>
    %6 = vector.broadcast %4 : vector<1x1280xf32> to vector<16x1280xf32>
    %7 = arith.subf %0, %6 : vector<16x1280xf32>
    %8 = arith.mulf %7, %7 : vector<16x1280xf32>
    %cst_8 = arith.constant 9.99999996E-13 : f32
    %cst_9 = arith.constant 9.99999995E+11 : f32
    %9 = vector.broadcast %cst_8 : f32 to vector<16x1280xf32>
    %10 = arith.maximumf %9, %8 : vector<16x1280xf32>
    %11 = vector.broadcast %cst_9 : f32 to vector<16x1280xf32>
    %12 = arith.minimumf %11, %10 : vector<16x1280xf32>
    %13 = arith.addf %2, %12 : vector<16x1280xf32>
    %c0_i32 = arith.constant 0 : i32
    %14 = vector.broadcast %c0_i32 : i32 to vector<16x1xi32>
    %15 = arith.cmpi eq, %1, %14 : vector<16x1xi32>
    %16 = vector.shape_cast %15 : vector<16x1xi1> to vector<16x1xi1>
    %17 = vector.broadcast %16 : vector<16x1xi1> to vector<16x1280xi1>
    %18 = arith.select %17, %12, %3 : vector<16x1280xi1>, vector<16x1280xf32>
    %19 = vector.broadcast %5 : vector<1x1280xf32> to vector<16x1280xf32>
    %20 = arith.mulf %0, %19 : vector<16x1280xf32>
    %cst_10 = arith.constant dense<0.000000e+00> : vector<16xf32>
    %21 = vector.multi_reduction <add>, %20, %cst_10 [1] : vector<16x1280xf32> to vector<16xf32>
    %22 = vector.shape_cast %21 : vector<16xf32> to vector<16x1xf32>
    %c0_11 = arith.constant 0 : index
    %c0_12 = arith.constant 0 : index
    %23 = vector.load %arg4[%c0_11, %c0_12] : memref<6x1xf32, #tpu.memory_space<vmem>>, vector<1x1xf32>
    %24 = vector.broadcast %23 : vector<1x1xf32> to vector<16x1xf32>
    %25 = arith.addf %22, %24 : vector<16x1xf32>
    %c1 = arith.constant 1 : index
    %c0_13 = arith.constant 0 : index
    %26 = vector.load %arg2[%c1, %c0_13] : memref<6x1280xf32, #tpu.memory_space<vmem>>, vector<1x1280xf32>
    %c1_14 = arith.constant 1 : index
    %c0_15 = arith.constant 0 : index
    %27 = vector.load %arg3[%c1_14, %c0_15] : memref<6x1280xf32, #tpu.memory_space<vmem>>, vector<1x1280xf32>
    %28 = vector.broadcast %26 : vector<1x1280xf32> to vector<16x1280xf32>
    %29 = arith.subf %0, %28 : vector<16x1280xf32>
    %30 = arith.mulf %29, %29 : vector<16x1280xf32>
    %cst_16 = arith.constant 9.99999996E-13 : f32
    %cst_17 = arith.constant 9.99999995E+11 : f32
    %31 = vector.broadcast %cst_16 : f32 to vector<16x1280xf32>
    %32 = arith.maximumf %31, %30 : vector<16x1280xf32>
    %33 = vector.broadcast %cst_17 : f32 to vector<16x1280xf32>
    %34 = arith.minimumf %33, %32 : vector<16x1280xf32>
    %35 = arith.addf %13, %34 : vector<16x1280xf32>
    %c1_i32 = arith.constant 1 : i32
    %36 = vector.broadcast %c1_i32 : i32 to vector<16x1xi32>
    %37 = arith.cmpi eq, %1, %36 : vector<16x1xi32>
    %38 = vector.shape_cast %37 : vector<16x1xi1> to vector<16x1xi1>
    %39 = vector.broadcast %38 : vector<16x1xi1> to vector<16x1280xi1>
    %40 = arith.select %39, %34, %18 : vector<16x1280xi1>, vector<16x1280xf32>
    %41 = vector.broadcast %27 : vector<1x1280xf32> to vector<16x1280xf32>
    %42 = arith.mulf %0, %41 : vector<16x1280xf32>
    %cst_18 = arith.constant dense<0.000000e+00> : vector<16xf32>
    %43 = vector.multi_reduction <add>, %42, %cst_18 [1] : vector<16x1280xf32> to vector<16xf32>
    %44 = vector.shape_cast %43 : vector<16xf32> to vector<16x1xf32>
    %c1_19 = arith.constant 1 : index
    %c0_20 = arith.constant 0 : index
    %45 = vector.load %arg4[%c1_19, %c0_20] : memref<6x1xf32, #tpu.memory_space<vmem>>, vector<1x1xf32>
    %46 = vector.broadcast %45 : vector<1x1xf32> to vector<16x1xf32>
    %47 = arith.addf %44, %46 : vector<16x1xf32>
    %c2 = arith.constant 2 : index
    %c0_21 = arith.constant 0 : index
    %48 = vector.load %arg2[%c2, %c0_21] : memref<6x1280xf32, #tpu.memory_space<vmem>>, vector<1x1280xf32>
    %c2_22 = arith.constant 2 : index
    %c0_23 = arith.constant 0 : index
    %49 = vector.load %arg3[%c2_22, %c0_23] : memref<6x1280xf32, #tpu.memory_space<vmem>>, vector<1x1280xf32>
    %50 = vector.broadcast %48 : vector<1x1280xf32> to vector<16x1280xf32>
    %51 = arith.subf %0, %50 : vector<16x1280xf32>
    %52 = arith.mulf %51, %51 : vector<16x1280xf32>
    %cst_24 = arith.constant 9.99999996E-13 : f32
    %cst_25 = arith.constant 9.99999995E+11 : f32
    %53 = vector.broadcast %cst_24 : f32 to vector<16x1280xf32>
    %54 = arith.maximumf %53, %52 : vector<16x1280xf32>
    %55 = vector.broadcast %cst_25 : f32 to vector<16x1280xf32>
    %56 = arith.minimumf %55, %54 : vector<16x1280xf32>
    %57 = arith.addf %35, %56 : vector<16x1280xf32>
    %c2_i32 = arith.constant 2 : i32
    %58 = vector.broadcast %c2_i32 : i32 to vector<16x1xi32>
    %59 = arith.cmpi eq, %1, %58 : vector<16x1xi32>
    %60 = vector.shape_cast %59 : vector<16x1xi1> to vector<16x1xi1>
    %61 = vector.broadcast %60 : vector<16x1xi1> to vector<16x1280xi1>
    %62 = arith.select %61, %56, %40 : vector<16x1280xi1>, vector<16x1280xf32>
    %63 = vector.broadcast %49 : vector<1x1280xf32> to vector<16x1280xf32>
    %64 = arith.mulf %0, %63 : vector<16x1280xf32>
    %cst_26 = arith.constant dense<0.000000e+00> : vector<16xf32>
    %65 = vector.multi_reduction <add>, %64, %cst_26 [1] : vector<16x1280xf32> to vector<16xf32>
    %66 = vector.shape_cast %65 : vector<16xf32> to vector<16x1xf32>
    %c2_27 = arith.constant 2 : index
    %c0_28 = arith.constant 0 : index
    %67 = vector.load %arg4[%c2_27, %c0_28] : memref<6x1xf32, #tpu.memory_space<vmem>>, vector<1x1xf32>
    %68 = vector.broadcast %67 : vector<1x1xf32> to vector<16x1xf32>
    %69 = arith.addf %66, %68 : vector<16x1xf32>
    %c3 = arith.constant 3 : index
    %c0_29 = arith.constant 0 : index
    %70 = vector.load %arg2[%c3, %c0_29] : memref<6x1280xf32, #tpu.memory_space<vmem>>, vector<1x1280xf32>
    %c3_30 = arith.constant 3 : index
    %c0_31 = arith.constant 0 : index
    %71 = vector.load %arg3[%c3_30, %c0_31] : memref<6x1280xf32, #tpu.memory_space<vmem>>, vector<1x1280xf32>
    %72 = vector.broadcast %70 : vector<1x1280xf32> to vector<16x1280xf32>
    %73 = arith.subf %0, %72 : vector<16x1280xf32>
    %74 = arith.mulf %73, %73 : vector<16x1280xf32>
    %cst_32 = arith.constant 9.99999996E-13 : f32
    %cst_33 = arith.constant 9.99999995E+11 : f32
    %75 = vector.broadcast %cst_32 : f32 to vector<16x1280xf32>
    %76 = arith.maximumf %75, %74 : vector<16x1280xf32>
    %77 = vector.broadcast %cst_33 : f32 to vector<16x1280xf32>
    %78 = arith.minimumf %77, %76 : vector<16x1280xf32>
    %79 = arith.addf %57, %78 : vector<16x1280xf32>
    %c3_i32 = arith.constant 3 : i32
    %80 = vector.broadcast %c3_i32 : i32 to vector<16x1xi32>
    %81 = arith.cmpi eq, %1, %80 : vector<16x1xi32>
    %82 = vector.shape_cast %81 : vector<16x1xi1> to vector<16x1xi1>
    %83 = vector.broadcast %82 : vector<16x1xi1> to vector<16x1280xi1>
    %84 = arith.select %83, %78, %62 : vector<16x1280xi1>, vector<16x1280xf32>
    %85 = vector.broadcast %71 : vector<1x1280xf32> to vector<16x1280xf32>
    %86 = arith.mulf %0, %85 : vector<16x1280xf32>
    %cst_34 = arith.constant dense<0.000000e+00> : vector<16xf32>
    %87 = vector.multi_reduction <add>, %86, %cst_34 [1] : vector<16x1280xf32> to vector<16xf32>
    %88 = vector.shape_cast %87 : vector<16xf32> to vector<16x1xf32>
    %c3_35 = arith.constant 3 : index
    %c0_36 = arith.constant 0 : index
    %89 = vector.load %arg4[%c3_35, %c0_36] : memref<6x1xf32, #tpu.memory_space<vmem>>, vector<1x1xf32>
    %90 = vector.broadcast %89 : vector<1x1xf32> to vector<16x1xf32>
    %91 = arith.addf %88, %90 : vector<16x1xf32>
    %c4 = arith.constant 4 : index
    %c0_37 = arith.constant 0 : index
    %92 = vector.load %arg2[%c4, %c0_37] : memref<6x1280xf32, #tpu.memory_space<vmem>>, vector<1x1280xf32>
    %c4_38 = arith.constant 4 : index
    %c0_39 = arith.constant 0 : index
    %93 = vector.load %arg3[%c4_38, %c0_39] : memref<6x1280xf32, #tpu.memory_space<vmem>>, vector<1x1280xf32>
    %94 = vector.broadcast %92 : vector<1x1280xf32> to vector<16x1280xf32>
    %95 = arith.subf %0, %94 : vector<16x1280xf32>
    %96 = arith.mulf %95, %95 : vector<16x1280xf32>
    %cst_40 = arith.constant 9.99999996E-13 : f32
    %cst_41 = arith.constant 9.99999995E+11 : f32
    %97 = vector.broadcast %cst_40 : f32 to vector<16x1280xf32>
    %98 = arith.maximumf %97, %96 : vector<16x1280xf32>
    %99 = vector.broadcast %cst_41 : f32 to vector<16x1280xf32>
    %100 = arith.minimumf %99, %98 : vector<16x1280xf32>
    %101 = arith.addf %79, %100 : vector<16x1280xf32>
    %c4_i32 = arith.constant 4 : i32
    %102 = vector.broadcast %c4_i32 : i32 to vector<16x1xi32>
    %103 = arith.cmpi eq, %1, %102 : vector<16x1xi32>
    %104 = vector.shape_cast %103 : vector<16x1xi1> to vector<16x1xi1>
    %105 = vector.broadcast %104 : vector<16x1xi1> to vector<16x1280xi1>
    %106 = arith.select %105, %100, %84 : vector<16x1280xi1>, vector<16x1280xf32>
    %107 = vector.broadcast %93 : vector<1x1280xf32> to vector<16x1280xf32>
    %108 = arith.mulf %0, %107 : vector<16x1280xf32>
    %cst_42 = arith.constant dense<0.000000e+00> : vector<16xf32>
    %109 = vector.multi_reduction <add>, %108, %cst_42 [1] : vector<16x1280xf32> to vector<16xf32>
    %110 = vector.shape_cast %109 : vector<16xf32> to vector<16x1xf32>
    %c4_43 = arith.constant 4 : index
    %c0_44 = arith.constant 0 : index
    %111 = vector.load %arg4[%c4_43, %c0_44] : memref<6x1xf32, #tpu.memory_space<vmem>>, vector<1x1xf32>
    %112 = vector.broadcast %111 : vector<1x1xf32> to vector<16x1xf32>
    %113 = arith.addf %110, %112 : vector<16x1xf32>
    %c5 = arith.constant 5 : index
    %c0_45 = arith.constant 0 : index
    %114 = vector.load %arg2[%c5, %c0_45] : memref<6x1280xf32, #tpu.memory_space<vmem>>, vector<1x1280xf32>
    %c5_46 = arith.constant 5 : index
    %c0_47 = arith.constant 0 : index
    %115 = vector.load %arg3[%c5_46, %c0_47] : memref<6x1280xf32, #tpu.memory_space<vmem>>, vector<1x1280xf32>
    %116 = vector.broadcast %114 : vector<1x1280xf32> to vector<16x1280xf32>
    %117 = arith.subf %0, %116 : vector<16x1280xf32>
    %118 = arith.mulf %117, %117 : vector<16x1280xf32>
    %cst_48 = arith.constant 9.99999996E-13 : f32
    %cst_49 = arith.constant 9.99999995E+11 : f32
    %119 = vector.broadcast %cst_48 : f32 to vector<16x1280xf32>
    %120 = arith.maximumf %119, %118 : vector<16x1280xf32>
    %121 = vector.broadcast %cst_49 : f32 to vector<16x1280xf32>
    %122 = arith.minimumf %121, %120 : vector<16x1280xf32>
    %123 = arith.addf %101, %122 : vector<16x1280xf32>
    %c5_i32 = arith.constant 5 : i32
    %124 = vector.broadcast %c5_i32 : i32 to vector<16x1xi32>
    %125 = arith.cmpi eq, %1, %124 : vector<16x1xi32>
    %126 = vector.shape_cast %125 : vector<16x1xi1> to vector<16x1xi1>
    %127 = vector.broadcast %126 : vector<16x1xi1> to vector<16x1280xi1>
    %128 = arith.select %127, %122, %106 : vector<16x1280xi1>, vector<16x1280xf32>
    %129 = vector.broadcast %115 : vector<1x1280xf32> to vector<16x1280xf32>
    %130 = arith.mulf %0, %129 : vector<16x1280xf32>
    %cst_50 = arith.constant dense<0.000000e+00> : vector<16xf32>
    %131 = vector.multi_reduction <add>, %130, %cst_50 [1] : vector<16x1280xf32> to vector<16xf32>
    %132 = vector.shape_cast %131 : vector<16xf32> to vector<16x1xf32>
    %c5_51 = arith.constant 5 : index
    %c0_52 = arith.constant 0 : index
    %133 = vector.load %arg4[%c5_51, %c0_52] : memref<6x1xf32, #tpu.memory_space<vmem>>, vector<1x1xf32>
    %134 = vector.broadcast %133 : vector<1x1xf32> to vector<16x1xf32>
    %135 = arith.addf %132, %134 : vector<16x1xf32>
    %136 = arith.maximumf %25, %47 : vector<16x1xf32>
    %137 = arith.maximumf %136, %69 : vector<16x1xf32>
    %138 = arith.maximumf %137, %91 : vector<16x1xf32>
    %139 = arith.maximumf %138, %113 : vector<16x1xf32>
    %140 = arith.maximumf %139, %135 : vector<16x1xf32>
    %cst_53 = arith.constant 0.000000e+00 : f32
    %141 = vector.broadcast %cst_53 : f32 to vector<16x1xf32>
    %cst_54 = arith.constant 0.000000e+00 : f32
    %142 = vector.broadcast %cst_54 : f32 to vector<16x1xf32>
    %143 = arith.subf %25, %140 : vector<16x1xf32>
    %144 = math.exp %143 : vector<16x1xf32>
    %145 = arith.addf %141, %144 : vector<16x1xf32>
    %c0_i32_55 = arith.constant 0 : i32
    %146 = vector.broadcast %c0_i32_55 : i32 to vector<16x1xi32>
    %147 = arith.cmpi eq, %1, %146 : vector<16x1xi32>
    %148 = arith.select %147, %25, %142 : vector<16x1xi1>, vector<16x1xf32>
    %149 = arith.subf %47, %140 : vector<16x1xf32>
    %150 = math.exp %149 : vector<16x1xf32>
    %151 = arith.addf %145, %150 : vector<16x1xf32>
    %c1_i32_56 = arith.constant 1 : i32
    %152 = vector.broadcast %c1_i32_56 : i32 to vector<16x1xi32>
    %153 = arith.cmpi eq, %1, %152 : vector<16x1xi32>
    %154 = arith.select %153, %47, %148 : vector<16x1xi1>, vector<16x1xf32>
    %155 = arith.subf %69, %140 : vector<16x1xf32>
    %156 = math.exp %155 : vector<16x1xf32>
    %157 = arith.addf %151, %156 : vector<16x1xf32>
    %c2_i32_57 = arith.constant 2 : i32
    %158 = vector.broadcast %c2_i32_57 : i32 to vector<16x1xi32>
    %159 = arith.cmpi eq, %1, %158 : vector<16x1xi32>
    %160 = arith.select %159, %69, %154 : vector<16x1xi1>, vector<16x1xf32>
    %161 = arith.subf %91, %140 : vector<16x1xf32>
    %162 = math.exp %161 : vector<16x1xf32>
    %163 = arith.addf %157, %162 : vector<16x1xf32>
    %c3_i32_58 = arith.constant 3 : i32
    %164 = vector.broadcast %c3_i32_58 : i32 to vector<16x1xi32>
    %165 = arith.cmpi eq, %1, %164 : vector<16x1xi32>
    %166 = arith.select %165, %91, %160 : vector<16x1xi1>, vector<16x1xf32>
    %167 = arith.subf %113, %140 : vector<16x1xf32>
    %168 = math.exp %167 : vector<16x1xf32>
    %169 = arith.addf %163, %168 : vector<16x1xf32>
    %c4_i32_59 = arith.constant 4 : i32
    %170 = vector.broadcast %c4_i32_59 : i32 to vector<16x1xi32>
    %171 = arith.cmpi eq, %1, %170 : vector<16x1xi32>
    %172 = arith.select %171, %113, %166 : vector<16x1xi1>, vector<16x1xf32>
    %173 = arith.subf %135, %140 : vector<16x1xf32>
    %174 = math.exp %173 : vector<16x1xf32>
    %175 = arith.addf %169, %174 : vector<16x1xf32>
    %c5_i32_60 = arith.constant 5 : i32
    %176 = vector.broadcast %c5_i32_60 : i32 to vector<16x1xi32>
    %177 = arith.cmpi eq, %1, %176 : vector<16x1xi32>
    %178 = arith.select %177, %135, %172 : vector<16x1xi1>, vector<16x1xf32>
    %179 = math.log %175 : vector<16x1xf32>
    %180 = arith.addf %140, %179 : vector<16x1xf32>
    %181 = arith.subf %180, %178 : vector<16x1xf32>
    %c0_61 = arith.constant 0 : index
    %c0_62 = arith.constant 0 : index
    %182 = vector.load %arg6[%c0_61, %c0_62] : memref<16x1xf32, #tpu.memory_space<vmem>>, vector<16x1xf32>
    tpu.vector_store %arg6[%c0_61, %c0_62], %181 {strides = array<i32>} : memref<16x1xf32, #tpu.memory_space<vmem>>, vector<16x1xf32>,
    %cst_63 = arith.constant dense<0.000000e+00> : vector<16xf32>
    %183 = vector.multi_reduction <add>, %128, %cst_63 [1] : vector<16x1280xf32> to vector<16xf32>
    %184 = vector.shape_cast %183 : vector<16xf32> to vector<16x1xf32>
    %cst_64 = arith.constant dense<0.000000e+00> : vector<16xf32>
    %185 = vector.multi_reduction <add>, %123, %cst_64 [1] : vector<16x1280xf32> to vector<16xf32>
    %186 = vector.shape_cast %185 : vector<16xf32> to vector<16x1xf32>
    %cst_65 = arith.constant 6.400000e-09 : f32
    %187 = vector.broadcast %cst_65 : f32 to vector<16x1xf32>
    %188 = arith.addf %184, %187 : vector<16x1xf32>
    %cst_66 = arith.constant 1.3020834E-4 : f32
    %189 = vector.broadcast %cst_66 : f32 to vector<16x1xf32>
    %190 = arith.mulf %188, %189 : vector<16x1xf32>
    %c0_67 = arith.constant 0 : index
    %c0_68 = arith.constant 0 : index
    %191 = vector.load %arg7[%c0_67, %c0_68] : memref<16x1xf32, #tpu.memory_space<vmem>>, vector<16x1xf32>
    tpu.vector_store %arg7[%c0_67, %c0_68], %190 {strides = array<i32>} : memref<16x1xf32, #tpu.memory_space<vmem>>, vector<16x1xf32>,
    %192 = arith.subf %186, %184 : vector<16x1xf32>
    %cst_69 = arith.constant 1.280000e-09 : f32
    %193 = vector.broadcast %cst_69 : f32 to vector<16x1xf32>
    %194 = arith.addf %192, %193 : vector<16x1xf32>
    %cst_70 = arith.constant 1.3020834E-4 : f32
    %195 = vector.broadcast %cst_70 : f32 to vector<16x1xf32>
    %196 = arith.mulf %194, %195 : vector<16x1xf32>
    %c0_71 = arith.constant 0 : index
    %c0_72 = arith.constant 0 : index
    %197 = vector.load %arg8[%c0_71, %c0_72] : memref<16x1xf32, #tpu.memory_space<vmem>>, vector<16x1xf32>
    tpu.vector_store %arg8[%c0_71, %c0_72], %196 {strides = array<i32>} : memref<16x1xf32, #tpu.memory_space<vmem>>, vector<16x1xf32>,
    return
  }
  func.func @transform_0(%arg0: i32) -> (i32, i32) {
    %c0_i32 = arith.constant 0 : i32
    %c0_i32_0 = arith.constant 0 : i32
    return %arg0, %c0_i32 : i32, i32
  }
  func.func @transform_1(%arg0: i32) -> (i32, i32) {
    %c0_i32 = arith.constant 0 : i32
    %c0_i32_0 = arith.constant 0 : i32
    %c0_i32_1 = arith.constant 0 : i32
    return %c0_i32, %c0_i32_0 : i32, i32
  }
  func.func @transform_2(%arg0: i32) -> (i32, i32) {
    %c0_i32 = arith.constant 0 : i32
    %c0_i32_0 = arith.constant 0 : i32
    %c0_i32_1 = arith.constant 0 : i32
    return %c0_i32, %c0_i32_0 : i32, i32
  }
  func.func @transform_3(%arg0: i32) -> (i32, i32) {
    %c0_i32 = arith.constant 0 : i32
    %c0_i32_0 = arith.constant 0 : i32
    %c0_i32_1 = arith.constant 0 : i32
    return %c0_i32, %c0_i32_0 : i32, i32
  }
  func.func @transform_4(%arg0: i32) -> (i32, i32) {
    %c0_i32 = arith.constant 0 : i32
    %c0_i32_0 = arith.constant 0 : i32
    return %arg0, %c0_i32 : i32, i32
  }
  func.func @transform_5(%arg0: i32) -> (i32, i32) {
    %c0_i32 = arith.constant 0 : i32
    %c0_i32_0 = arith.constant 0 : i32
    return %arg0, %c0_i32 : i32, i32
  }
  func.func @transform_6(%arg0: i32) -> (i32, i32) {
    %c0_i32 = arith.constant 0 : i32
    %c0_i32_0 = arith.constant 0 : i32
    return %arg0, %c0_i32 : i32, i32
  }
  func.func @transform_7(%arg0: i32) -> (i32, i32) {
    %c0_i32 = arith.constant 0 : i32
    %c0_i32_0 = arith.constant 0 : i32
    return %arg0, %c0_i32 : i32, i32
  }
}

</mosaic_0001>

<llo_original>
// kernel: tpu_custom_call.1
$region0: #{tpu_custom_call.1}
  #allocation0 [shape = 'u32[]', space=smem, size = 0x4, offset = 0x4, fixed_abs, tag = 'smem constant byte address 0x4 - core index']
  #allocation1 [shape = 'u32[144,128]{1,0:T(1,128)}', space=vmem, size = 0x12000, scoped, tag = 'internal scratch']
  %s0 = inlined_call_operand.hbm [shape: f32[16,1280], index: 0, kind: input, shape index: {}]
  %s1 = inlined_call_operand.hbm [shape: f32[6,1280], index: 1, kind: input, shape index: {}]
  %s2 = inlined_call_operand.hbm [shape: f32[6,1280], index: 2, kind: input, shape index: {}]
  %s3 = inlined_call_operand.vmem [shape: f32[6,1], index: 3, kind: input, shape index: {}]
  %s4 = inlined_call_operand.vmem [shape: s32[16,1], index: 4, kind: input, shape index: {}]
  %s5 = inlined_call_operand.vmem [shape: f32[16,1], index: 5, kind: output, shape index: {0}]
  %s6 = inlined_call_operand.vmem [shape: f32[16,1], index: 6, kind: output, shape index: {1}]
  %s7 = inlined_call_operand.vmem [shape: f32[16,1], index: 7, kind: output, shape index: {2}]
  %8 = xla_tuple %s5, %s6, %s7
  %s9 = sld [smem:[#allocation0]]
  $region58: #{tpu_custom_call.1} parent=0
    _
  %s11 = ssub.s32 1, %s9
  %s12 = scalar_select 0, %s11, %s9
  $region1: #{tpu_custom_call.1} parent=0
    #allocation2 [shape = 'u8[81920]{0}', space=vmem, size = 0x14000, scoped, tag = 'input window, operand 0, single buffered']
    #allocation3 [shape = 's32[1]{0}', space=sflag, size = 0x4, scoped, tag = 'scoped memory for tpu_custom_call.1']
    #allocation4 [shape = 'u8[40960]{0}', space=vmem, size = 0xa000, scoped, tag = 'input window, operand 1, single buffered']
    #allocation5 [shape = 's32[1]{0}', space=sflag, size = 0x4, scoped, tag = 'scoped memory for tpu_custom_call.1']
    #allocation6 [shape = 'u8[40960]{0}', space=vmem, size = 0xa000, scoped, tag = 'input window, operand 2, single buffered']
    %13 = vsyncpa [#allocation3], 0
    %14 = vsyncpa [#allocation5], 0
    // Predicated region
    $region2: #{tpu_custom_call.1} parent=1 // pred_check
      _
    $region3: #{tpu_custom_call.1} parent=1 // pred_check_branch
      %16 = sbr.rel (0) target = $region5
    $region4: #{tpu_custom_call.1} parent=1 // pred_region
      %s18 = ssub.s32 2560, 2560
      %19 = vsyncadd [#allocation3], %s18
      %s20 = sshll.u32 [#allocation2], 4
      %s21 = int_to_ptr.vmem [resolvable:$true] %s20
      %26 = dma.hbm_to_vmem [thread:$0]  %s0, 2560, %s21, [#allocation3], 1280, 1280, 80
    $region5: #{tpu_custom_call.1} parent=1 // pred_fallthru
      _
    // Predicated region
    $region6: #{tpu_custom_call.1} parent=1 // pred_check
      _
    $region7: #{tpu_custom_call.1} parent=1 // pred_check_branch
      %28 = sbr.rel (0) target = $region9
    $region8: #{tpu_custom_call.1} parent=1 // pred_region
      %s30 = ssub.s32 1280, 1280
      %31 = vsyncadd [#allocation5], %s30
      %s33 = sshll.u32 [#allocation4], 4
      %s34 = int_to_ptr.vmem [resolvable:$true] %s33
      %36 = dma.hbm_to_vmem [thread:$0]  %s1, 1280, %s34, [#allocation5]
    $region9: #{tpu_custom_call.1} parent=1 // pred_fallthru
      _
    // Predicated region
    $region10: #{tpu_custom_call.1} parent=1 // pred_check
      _
    $region11: #{tpu_custom_call.1} parent=1 // pred_check_branch
      %38 = sbr.rel (0) target = $region13
    $region12: #{tpu_custom_call.1} parent=1 // pred_region
      %s40 = ssub.s32 1280, 1280
      %41 = vsyncadd [#allocation5], %s40
      %s43 = sshll.u32 [#allocation6], 4
      %s44 = int_to_ptr.vmem [resolvable:$true] %s43
      %46 = dma.hbm_to_vmem [thread:$0]  %s2, 1280, %s44, [#allocation5]
    $region13: #{tpu_custom_call.1} parent=1 // pred_fallthru
      _
    // Predicated region
    $region14: #{tpu_custom_call.1} parent=1 // pred_check
      _
    $region15: #{tpu_custom_call.1} parent=1 // pred_check_branch
      %48 = sbr.rel (0) target = $region17
    $region16: #{tpu_custom_call.1} parent=1 // pred_region
      _
    $region17: #{tpu_custom_call.1} parent=1 // pred_fallthru
      _
    // Predicated region
    $region18: #{tpu_custom_call.1} parent=1 // pred_check
      _
    $region19: #{tpu_custom_call.1} parent=1 // pred_check_branch
      %50 = sbr.rel (0) target = $region21
    $region20: #{tpu_custom_call.1} parent=1 // pred_region
      _
    $region21: #{tpu_custom_call.1} parent=1 // pred_fallthru
      _
    // Predicated region
    $region22: #{tpu_custom_call.1} parent=1 // pred_check
      _
    $region23: #{tpu_custom_call.1} parent=1 // pred_check_branch
      %52 = sbr.rel (0) target = $region25
    $region24: #{tpu_custom_call.1} parent=1 // pred_region
      %53 = dma.done [#allocation3], 2560
    $region25: #{tpu_custom_call.1} parent=1 // pred_fallthru
      _
    // Predicated region
    $region26: #{tpu_custom_call.1} parent=1 // pred_check
      _
    $region27: #{tpu_custom_call.1} parent=1 // pred_check_branch
      %55 = sbr.rel (0) target = $region29
    $region28: #{tpu_custom_call.1} parent=1 // pred_region
      %56 = dma.done [#allocation5], 1280
    $region29: #{tpu_custom_call.1} parent=1 // pred_fallthru
      _
    // Predicated region
    $region30: #{tpu_custom_call.1} parent=1 // pred_check
      _
    $region31: #{tpu_custom_call.1} parent=1 // pred_check_branch
      %58 = sbr.rel (0) target = $region33
    $region32: #{tpu_custom_call.1} parent=1 // pred_region
      %59 = dma.done [#allocation5], 1280
    $region33: #{tpu_custom_call.1} parent=1 // pred_fallthru
      _
    %v60 = vld [vmem:[#allocation2] sm:$0xff]
    %v61 = vld [vmem:[#allocation2 + $0x8] sm:$0xff]
    %v62 = vld [vmem:[#allocation2 + $0x10] sm:$0xff]
    %v63 = vld [vmem:[#allocation2 + $0x18] sm:$0xff]
    %v64 = vld [vmem:[#allocation2 + $0x20] sm:$0xff]
    %v65 = vld [vmem:[#allocation2 + $0x28] sm:$0xff]
    %v66 = vld [vmem:[#allocation2 + $0x30] sm:$0xff]
    %v67 = vld [vmem:[#allocation2 + $0x38] sm:$0xff]
    %v68 = vld [vmem:[#allocation2 + $0x40] sm:$0xff]
    %v69 = vld [vmem:[#allocation2 + $0x48] sm:$0xff]
    %v70 = vld [vmem:[#allocation2 + $0x50] sm:$0xff]
    %v71 = vld [vmem:[#allocation2 + $0x58] sm:$0xff]
    %v72 = vld [vmem:[#allocation2 + $0x60] sm:$0xff]
    %v73 = vld [vmem:[#allocation2 + $0x68] sm:$0xff]
    %v74 = vld [vmem:[#allocation2 + $0x70] sm:$0xff]
    %v75 = vld [vmem:[#allocation2 + $0x78] sm:$0xff]
    %v76 = vld [vmem:[#allocation2 + $0x80] sm:$0xff]
    %v77 = vld [vmem:[#allocation2 + $0x88] sm:$0xff]
    %v78 = vld [vmem:[#allocation2 + $0x90] sm:$0xff]
    %v79 = vld [vmem:[#allocation2 + $0x98] sm:$0xff]
    %v80 = vld [vmem:[%s4] sm:$0xff]
    %v81 = vld [vmem:[%s4 + $0x8] sm:$0xff]
    %v82 = vld [vmem:[#allocation4] ss:$8 sm:$0xf]
    %v83 = vld [vmem:[#allocation4] ss:$8 sm:$0xf0]
    %v84 = vor.u32 %v82, %v83
    %s85 = scalar_lea.vmem [#allocation4], 64
    %v86 = vld [vmem:[%s85] ss:$8 sm:$0x3]
    %v87 = vld [vmem:[#allocation6] ss:$8 sm:$0xf]
    %v88 = vld [vmem:[#allocation6] ss:$8 sm:$0xf0]
    %v89 = vor.u32 %v87, %v88
    %s90 = scalar_lea.vmem [#allocation6], 64
    %v91 = vld [vmem:[%s90] ss:$8 sm:$0x3]
    %v94 = vlaneseq
    %v95 = vshrl.u32 %v94, 7
    %v96 = vsub.s32 0, %v95
    %v97 = vrot.slane %v84, %v96
    %v98 = vlaneseq
    %v99 = vshrl.u32 %v98, 7
    %v100 = vsub.s32 1, %v99
    %v101 = vrot.slane %v84, %v100
    %v102 = vlaneseq
    %v103 = vshrl.u32 %v102, 7
    %v104 = vsub.s32 2, %v103
    %v105 = vrot.slane %v84, %v104
    %v106 = vlaneseq
    %v107 = vshrl.u32 %v106, 7
    %v108 = vsub.s32 3, %v107
    %v109 = vrot.slane %v84, %v108
    %v110 = vlaneseq
    %v111 = vshrl.u32 %v110, 7
    %v112 = vsub.s32 4, %v111
    %v113 = vrot.slane %v84, %v112
    %v114 = vlaneseq
    %v115 = vshrl.u32 %v114, 7
    %v116 = vsub.s32 5, %v115
    %v117 = vrot.slane %v84, %v116
    %v118 = vlaneseq
    %v119 = vshrl.u32 %v118, 7
    %v120 = vsub.s32 6, %v119
    %v121 = vrot.slane %v84, %v120
    %v122 = vlaneseq
    %v123 = vshrl.u32 %v122, 7
    %v124 = vsub.s32 7, %v123
    %v125 = vrot.slane %v84, %v124
    %v126 = vlaneseq
    %v127 = vshrl.u32 %v126, 7
    %v128 = vsub.s32 0, %v127
    %v129 = vrot.slane %v86, %v128
    %v130 = vlaneseq
    %v131 = vshrl.u32 %v130, 7
    %v132 = vsub.s32 1, %v131
    %v133 = vrot.slane %v86, %v132
    %v144 = vsub.f32 %v60, %v97
    %v145 = vsub.f32 %v61, %v101
    %v146 = vsub.f32 %v62, %v105
    %v147 = vsub.f32 %v63, %v109
    %v148 = vsub.f32 %v64, %v113
    %v149 = vsub.f32 %v65, %v117
    %v150 = vsub.f32 %v66, %v121
    %v151 = vsub.f32 %v67, %v125
    %v152 = vsub.f32 %v68, %v129
    %v153 = vsub.f32 %v69, %v133
    %v154 = vsub.f32 %v70, %v97
    %v155 = vsub.f32 %v71, %v101
    %v156 = vsub.f32 %v72, %v105
    %v157 = vsub.f32 %v73, %v109
    %v158 = vsub.f32 %v74, %v113
    %v159 = vsub.f32 %v75, %v117
    %v160 = vsub.f32 %v76, %v121
    %v161 = vsub.f32 %v77, %v125
    %v162 = vsub.f32 %v78, %v129
    %v163 = vsub.f32 %v79, %v133
    %v164 = vmul.f32 %v144, %v144
    %v165 = vmul.f32 %v145, %v145
    %v166 = vmul.f32 %v146, %v146
    %v167 = vmul.f32 %v147, %v147
    %v168 = vmul.f32 %v148, %v148
    %v169 = vmul.f32 %v149, %v149
    %v170 = vmul.f32 %v150, %v150
    %v171 = vmul.f32 %v151, %v151
    %v172 = vmul.f32 %v152, %v152
    %v173 = vmul.f32 %v153, %v153
    %v174 = vmul.f32 %v154, %v154
    %v175 = vmul.f32 %v155, %v155
    %v176 = vmul.f32 %v156, %v156
    %v177 = vmul.f32 %v157, %v157
    %v178 = vmul.f32 %v158, %v158
    %v179 = vmul.f32 %v159, %v159
    %v180 = vmul.f32 %v160, %v160
    %v181 = vmul.f32 %v161, %v161
    %v182 = vmul.f32 %v162, %v162
    %v183 = vmul.f32 %v163, %v163
    %v184 = vmax.f32 %v164, 1e-12
    %v185 = vmax.f32 %v165, 1e-12
    %v186 = vmax.f32 %v166, 1e-12
    %v187 = vmax.f32 %v167, 1e-12
    %v188 = vmax.f32 %v168, 1e-12
    %v189 = vmax.f32 %v169, 1e-12
    %v190 = vmax.f32 %v170, 1e-12
    %v191 = vmax.f32 %v171, 1e-12
    %v192 = vmax.f32 %v172, 1e-12
    %v193 = vmax.f32 %v173, 1e-12
    %v194 = vmax.f32 %v174, 1e-12
    %v195 = vmax.f32 %v175, 1e-12
    %v196 = vmax.f32 %v176, 1e-12
    %v197 = vmax.f32 %v177, 1e-12
    %v198 = vmax.f32 %v178, 1e-12
    %v199 = vmax.f32 %v179, 1e-12
    %v200 = vmax.f32 %v180, 1e-12
    %v201 = vmax.f32 %v181, 1e-12
    %v202 = vmax.f32 %v182, 1e-12
    %v203 = vmax.f32 %v183, 1e-12
    %v204 = vmin.f32 %v184, 1e+12
    %v205 = vmin.f32 %v185, 1e+12
    %v206 = vmin.f32 %v186, 1e+12
    %v207 = vmin.f32 %v187, 1e+12
    %v208 = vmin.f32 %v188, 1e+12
    %v209 = vmin.f32 %v189, 1e+12
    %v210 = vmin.f32 %v190, 1e+12
    %v211 = vmin.f32 %v191, 1e+12
    %v212 = vmin.f32 %v192, 1e+12
    %v213 = vmin.f32 %v193, 1e+12
    %v214 = vmin.f32 %v194, 1e+12
    %v215 = vmin.f32 %v195, 1e+12
    %v216 = vmin.f32 %v196, 1e+12
    %v217 = vmin.f32 %v197, 1e+12
    %v218 = vmin.f32 %v198, 1e+12
    %v219 = vmin.f32 %v199, 1e+12
    %v220 = vmin.f32 %v200, 1e+12
    %v221 = vmin.f32 %v201, 1e+12
    %v222 = vmin.f32 %v202, 1e+12
    %v223 = vmin.f32 %v203, 1e+12
    %v224 = vadd.f32 %v204, 0.0
    %v225 = vadd.f32 %v205, 0.0
    %v226 = vadd.f32 %v206, 0.0
    %v227 = vadd.f32 %v207, 0.0
    %v228 = vadd.f32 %v208, 0.0
    %v229 = vadd.f32 %v209, 0.0
    %v230 = vadd.f32 %v210, 0.0
    %v231 = vadd.f32 %v211, 0.0
    %v232 = vadd.f32 %v212, 0.0
    %v233 = vadd.f32 %v213, 0.0
    %v234 = vadd.f32 %v214, 0.0
    %v235 = vadd.f32 %v215, 0.0
    %v236 = vadd.f32 %v216, 0.0
    %v237 = vadd.f32 %v217, 0.0
    %v238 = vadd.f32 %v218, 0.0
    %v239 = vadd.f32 %v219, 0.0
    %v240 = vadd.f32 %v220, 0.0
    %v241 = vadd.f32 %v221, 0.0
    %v242 = vadd.f32 %v222, 0.0
    %v243 = vadd.f32 %v223, 0.0
    %vm244 = vcmp.eq.s32.totalorder %v80, 0
    %vm245 = vcmp.eq.s32.totalorder %v81, 0
    %v246 = vsel %vm244, 1, 0
    %v247 = vsel %vm245, 1, 0
    %248 = vset.pattern.permute.xlu0 0
    %249 = vperm.xlu0 %248, %v246
    %v250 = vpop.permute.xlu0 %249
    %251 = vset.pattern.permute.xlu0 0
    %252 = vperm.xlu0 %251, %v247
    %v253 = vpop.permute.xlu0 %252
    %vm254 = vcmp.eq.s32.totalorder %v250, 1
    %vm255 = vcmp.eq.s32.totalorder %v253, 1
    %v256 = vsel %vm254, %v204, 0.0
    %v257 = vsel %vm254, %v205, 0.0
    %v258 = vsel %vm254, %v206, 0.0
    %v259 = vsel %vm254, %v207, 0.0
    %v260 = vsel %vm254, %v208, 0.0
    %v261 = vsel %vm254, %v209, 0.0
    %v262 = vsel %vm254, %v210, 0.0
    %v263 = vsel %vm254, %v211, 0.0
    %v264 = vsel %vm254, %v212, 0.0
    %v265 = vsel %vm254, %v213, 0.0
    %v266 = vsel %vm255, %v214, 0.0
    %v267 = vsel %vm255, %v215, 0.0
    %v268 = vsel %vm255, %v216, 0.0
    %v269 = vsel %vm255, %v217, 0.0
    %v270 = vsel %vm255, %v218, 0.0
    %v271 = vsel %vm255, %v219, 0.0
    %v272 = vsel %vm255, %v220, 0.0
    %v273 = vsel %vm255, %v221, 0.0
    %v274 = vsel %vm255, %v222, 0.0
    %v275 = vsel %vm255, %v223, 0.0
    %v278 = vlaneseq
    %v279 = vshrl.u32 %v278, 7
    %v280 = vsub.s32 0, %v279
    %v281 = vrot.slane %v89, %v280
    %v282 = vlaneseq
    %v283 = vshrl.u32 %v282, 7
    %v284 = vsub.s32 1, %v283
    %v285 = vrot.slane %v89, %v284
    %v286 = vlaneseq
    %v287 = vshrl.u32 %v286, 7
    %v288 = vsub.s32 2, %v287
    %v289 = vrot.slane %v89, %v288
    %v290 = vlaneseq
    %v291 = vshrl.u32 %v290, 7
    %v292 = vsub.s32 3, %v291
    %v293 = vrot.slane %v89, %v292
    %v294 = vlaneseq
    %v295 = vshrl.u32 %v294, 7
    %v296 = vsub.s32 4, %v295
    %v297 = vrot.slane %v89, %v296
    %v298 = vlaneseq
    %v299 = vshrl.u32 %v298, 7
    %v300 = vsub.s32 5, %v299
    %v301 = vrot.slane %v89, %v300
    %v302 = vlaneseq
    %v303 = vshrl.u32 %v302, 7
    %v304 = vsub.s32 6, %v303
    %v305 = vrot.slane %v89, %v304
    %v306 = vlaneseq
    %v307 = vshrl.u32 %v306, 7
    %v308 = vsub.s32 7, %v307
    %v309 = vrot.slane %v89, %v308
    %v310 = vlaneseq
    %v311 = vshrl.u32 %v310, 7
    %v312 = vsub.s32 0, %v311
    %v313 = vrot.slane %v91, %v312
    %v314 = vlaneseq
    %v315 = vshrl.u32 %v314, 7
    %v316 = vsub.s32 1, %v315
    %v317 = vrot.slane %v91, %v316
    %v328 = vmul.f32 %v60, %v281
    %v329 = vmul.f32 %v61, %v285
    %v330 = vmul.f32 %v62, %v289
    %v331 = vmul.f32 %v63, %v293
    %v332 = vmul.f32 %v64, %v297
    %v333 = vmul.f32 %v65, %v301
    %v334 = vmul.f32 %v66, %v305
    %v335 = vmul.f32 %v67, %v309
    %v336 = vmul.f32 %v68, %v313
    %v337 = vmul.f32 %v69, %v317
    %v338 = vmul.f32 %v70, %v281
    %v339 = vmul.f32 %v71, %v285
    %v340 = vmul.f32 %v72, %v289
    %v341 = vmul.f32 %v73, %v293
    %v342 = vmul.f32 %v74, %v297
    %v343 = vmul.f32 %v75, %v301
    %v344 = vmul.f32 %v76, %v305
    %v345 = vmul.f32 %v77, %v309
    %v346 = vmul.f32 %v78, %v313
    %v347 = vmul.f32 %v79, %v317
    %v348 = vadd.f32 %v328, %v329
    %v349 = vadd.f32 %v348, %v330
    %v350 = vadd.f32 %v349, %v331
    %v351 = vadd.f32 %v350, %v332
    %v352 = vadd.f32 %v351, %v333
    %v353 = vadd.f32 %v352, %v334
    %v354 = vadd.f32 %v353, %v335
    %v355 = vadd.f32 %v354, %v336
    %v356 = vadd.f32 %v355, %v337
    %357 = vadd.xlane.f32.xlu0 %v356
    %v358 = vpop.xlane.xlu0 %357
    %v359 = vadd.f32 %v338, %v339
    %v360 = vadd.f32 %v359, %v340
    %v361 = vadd.f32 %v360, %v341
    %v362 = vadd.f32 %v361, %v342
    %v363 = vadd.f32 %v362, %v343
    %v364 = vadd.f32 %v363, %v344
    %v365 = vadd.f32 %v364, %v345
    %v366 = vadd.f32 %v365, %v346
    %v367 = vadd.f32 %v366, %v347
    %368 = vadd.xlane.f32.xlu0 %v367
    %v369 = vpop.xlane.xlu0 %368
    %v370 = vld [vmem:[%s3] sm:$0x1]
    %v371 = vlaneseq
    %v372 = vshrl.u32 %v371, 7
    %v373 = vsub.s32 0, %v372
    %v374 = vrot.slane %v370, %v373
    %v375 = vadd.f32 %v358, %v374
    %v376 = vadd.f32 %v369, %v374
    %s377 = scalar_lea.vmem [#allocation4], 1
    %v378 = vld [vmem:[%s377] ss:$8 sm:$0xf]
    %v379 = vld [vmem:[%s377] ss:$8 sm:$0xf0]
    %v380 = vor.u32 %v378, %v379
    %s381 = scalar_lea.vmem [#allocation4], 65
    %v382 = vld [vmem:[%s381] ss:$8 sm:$0x3]
    %s383 = scalar_lea.vmem [#allocation6], 1
    %v384 = vld [vmem:[%s383] ss:$8 sm:$0xf]
    %v385 = vld [vmem:[%s383] ss:$8 sm:$0xf0]
    %v386 = vor.u32 %v384, %v385
    %s387 = scalar_lea.vmem [#allocation6], 65
    %v388 = vld [vmem:[%s387] ss:$8 sm:$0x3]
    %v391 = vlaneseq
    %v392 = vshrl.u32 %v391, 7
    %v393 = vsub.s32 0, %v392
    %v394 = vrot.slane %v380, %v393
    %v395 = vlaneseq
    %v396 = vshrl.u32 %v395, 7
    %v397 = vsub.s32 1, %v396
    %v398 = vrot.slane %v380, %v397
    %v399 = vlaneseq
    %v400 = vshrl.u32 %v399, 7
    %v401 = vsub.s32 2, %v400
    %v402 = vrot.slane %v380, %v401
    %v403 = vlaneseq
    %v404 = vshrl.u32 %v403, 7
    %v405 = vsub.s32 3, %v404
    %v406 = vrot.slane %v380, %v405
    %v407 = vlaneseq
    %v408 = vshrl.u32 %v407, 7
    %v409 = vsub.s32 4, %v408
    %v410 = vrot.slane %v380, %v409
    %v411 = vlaneseq
    %v412 = vshrl.u32 %v411, 7
    %v413 = vsub.s32 5, %v412
    %v414 = vrot.slane %v380, %v413
    %v415 = vlaneseq
    %v416 = vshrl.u32 %v415, 7
    %v417 = vsub.s32 6, %v416
    %v418 = vrot.slane %v380, %v417
    %v419 = vlaneseq
    %v420 = vshrl.u32 %v419, 7
    %v421 = vsub.s32 7, %v420
    %v422 = vrot.slane %v380, %v421
    %v423 = vlaneseq
    %v424 = vshrl.u32 %v423, 7
    %v425 = vsub.s32 0, %v424
    %v426 = vrot.slane %v382, %v425
    %v427 = vlaneseq
    %v428 = vshrl.u32 %v427, 7
    %v429 = vsub.s32 1, %v428
    %v430 = vrot.slane %v382, %v429
    %v441 = vsub.f32 %v60, %v394
    %v442 = vsub.f32 %v61, %v398
    %v443 = vsub.f32 %v62, %v402
    %v444 = vsub.f32 %v63, %v406
    %v445 = vsub.f32 %v64, %v410
    %v446 = vsub.f32 %v65, %v414
    %v447 = vsub.f32 %v66, %v418
    %v448 = vsub.f32 %v67, %v422
    %v449 = vsub.f32 %v68, %v426
    %v450 = vsub.f32 %v69, %v430
    %v451 = vsub.f32 %v70, %v394
    %v452 = vsub.f32 %v71, %v398
    %v453 = vsub.f32 %v72, %v402
    %v454 = vsub.f32 %v73, %v406
    %v455 = vsub.f32 %v74, %v410
    %v456 = vsub.f32 %v75, %v414
    %v457 = vsub.f32 %v76, %v418
    %v458 = vsub.f32 %v77, %v422
    %v459 = vsub.f32 %v78, %v426
    %v460 = vsub.f32 %v79, %v430
    %v461 = vmul.f32 %v441, %v441
    %v462 = vmul.f32 %v442, %v442
    %v463 = vmul.f32 %v443, %v443
    %v464 = vmul.f32 %v444, %v444
    %v465 = vmul.f32 %v445, %v445
    %v466 = vmul.f32 %v446, %v446
    %v467 = vmul.f32 %v447, %v447
    %v468 = vmul.f32 %v448, %v448
    %v469 = vmul.f32 %v449, %v449
    %v470 = vmul.f32 %v450, %v450
    %v471 = vmul.f32 %v451, %v451
    %v472 = vmul.f32 %v452, %v452
    %v473 = vmul.f32 %v453, %v453
    %v474 = vmul.f32 %v454, %v454
    %v475 = vmul.f32 %v455, %v455
    %v476 = vmul.f32 %v456, %v456
    %v477 = vmul.f32 %v457, %v457
    %v478 = vmul.f32 %v458, %v458
    %v479 = vmul.f32 %v459, %v459
    %v480 = vmul.f32 %v460, %v460
    %v481 = vmax.f32 %v461, 1e-12
    %v482 = vmax.f32 %v462, 1e-12
    %v483 = vmax.f32 %v463, 1e-12
    %v484 = vmax.f32 %v464, 1e-12
    %v485 = vmax.f32 %v465, 1e-12
    %v486 = vmax.f32 %v466, 1e-12
    %v487 = vmax.f32 %v467, 1e-12
    %v488 = vmax.f32 %v468, 1e-12
    %v489 = vmax.f32 %v469, 1e-12
    %v490 = vmax.f32 %v470, 1e-12
    %v491 = vmax.f32 %v471, 1e-12
    %v492 = vmax.f32 %v472, 1e-12
    %v493 = vmax.f32 %v473, 1e-12
    %v494 = vmax.f32 %v474, 1e-12
    %v495 = vmax.f32 %v475, 1e-12
    %v496 = vmax.f32 %v476, 1e-12
    %v497 = vmax.f32 %v477, 1e-12
    %v498 = vmax.f32 %v478, 1e-12
    %v499 = vmax.f32 %v479, 1e-12
    %v500 = vmax.f32 %v480, 1e-12
    %v501 = vmin.f32 %v481, 1e+12
    %v502 = vmin.f32 %v482, 1e+12
    %v503 = vmin.f32 %v483, 1e+12
    %v504 = vmin.f32 %v484, 1e+12
    %v505 = vmin.f32 %v485, 1e+12
    %v506 = vmin.f32 %v486, 1e+12
    %v507 = vmin.f32 %v487, 1e+12
    %v508 = vmin.f32 %v488, 1e+12
    %v509 = vmin.f32 %v489, 1e+12
    %v510 = vmin.f32 %v490, 1e+12
    %v511 = vmin.f32 %v491, 1e+12
    %v512 = vmin.f32 %v492, 1e+12
    %v513 = vmin.f32 %v493, 1e+12
    %v514 = vmin.f32 %v494, 1e+12
    %v515 = vmin.f32 %v495, 1e+12
    %v516 = vmin.f32 %v496, 1e+12
    %v517 = vmin.f32 %v497, 1e+12
    %v518 = vmin.f32 %v498, 1e+12
    %v519 = vmin.f32 %v499, 1e+12
    %v520 = vmin.f32 %v500, 1e+12
    %v521 = vadd.f32 %v224, %v501
    %v522 = vadd.f32 %v225, %v502
    %v523 = vadd.f32 %v226, %v503
    %v524 = vadd.f32 %v227, %v504
    %v525 = vadd.f32 %v228, %v505
    %v526 = vadd.f32 %v229, %v506
    %v527 = vadd.f32 %v230, %v507
    %v528 = vadd.f32 %v231, %v508
    %v529 = vadd.f32 %v232, %v509
    %v530 = vadd.f32 %v233, %v510
    %v531 = vadd.f32 %v234, %v511
    %v532 = vadd.f32 %v235, %v512
    %v533 = vadd.f32 %v236, %v513
    %v534 = vadd.f32 %v237, %v514
    %v535 = vadd.f32 %v238, %v515
    %v536 = vadd.f32 %v239, %v516
    %v537 = vadd.f32 %v240, %v517
    %v538 = vadd.f32 %v241, %v518
    %v539 = vadd.f32 %v242, %v519
    %v540 = vadd.f32 %v243, %v520
    %vm541 = vcmp.eq.s32.totalorder %v80, 1
    %vm542 = vcmp.eq.s32.totalorder %v81, 1
    %v543 = vsel %vm541, 1, 0
    %v544 = vsel %vm542, 1, 0
    %545 = vset.pattern.permute.xlu0 0
    %546 = vperm.xlu0 %545, %v543
    %v547 = vpop.permute.xlu0 %546
    %548 = vset.pattern.permute.xlu0 0
    %549 = vperm.xlu0 %548, %v544
    %v550 = vpop.permute.xlu0 %549
    %vm551 = vcmp.eq.s32.totalorder %v547, 1
    %vm552 = vcmp.eq.s32.totalorder %v550, 1
    %v553 = vsel %vm551, %v501, %v256
    %v554 = vsel %vm551, %v502, %v257
    %v555 = vsel %vm551, %v503, %v258
    %v556 = vsel %vm551, %v504, %v259
    %v557 = vsel %vm551, %v505, %v260
    %v558 = vsel %vm551, %v506, %v261
    %v559 = vsel %vm551, %v507, %v262
    %v560 = vsel %vm551, %v508, %v263
    %v561 = vsel %vm551, %v509, %v264
    %v562 = vsel %vm551, %v510, %v265
    %v563 = vsel %vm552, %v511, %v266
    %v564 = vsel %vm552, %v512, %v267
    %v565 = vsel %vm552, %v513, %v268
    %v566 = vsel %vm552, %v514, %v269
    %v567 = vsel %vm552, %v515, %v270
    %v568 = vsel %vm552, %v516, %v271
    %v569 = vsel %vm552, %v517, %v272
    %v570 = vsel %vm552, %v518, %v273
    %v571 = vsel %vm552, %v519, %v274
    %v572 = vsel %vm552, %v520, %v275
    %v575 = vlaneseq
    %v576 = vshrl.u32 %v575, 7
    %v577 = vsub.s32 0, %v576
    %v578 = vrot.slane %v386, %v577
    %v579 = vlaneseq
    %v580 = vshrl.u32 %v579, 7
    %v581 = vsub.s32 1, %v580
    %v582 = vrot.slane %v386, %v581
    %v583 = vlaneseq
    %v584 = vshrl.u32 %v583, 7
    %v585 = vsub.s32 2, %v584
    %v586 = vrot.slane %v386, %v585
    %v587 = vlaneseq
    %v588 = vshrl.u32 %v587, 7
    %v589 = vsub.s32 3, %v588
    %v590 = vrot.slane %v386, %v589
    %v591 = vlaneseq
    %v592 = vshrl.u32 %v591, 7
    %v593 = vsub.s32 4, %v592
    %v594 = vrot.slane %v386, %v593
    %v595 = vlaneseq
    %v596 = vshrl.u32 %v595, 7
    %v597 = vsub.s32 5, %v596
    %v598 = vrot.slane %v386, %v597
    %v599 = vlaneseq
    %v600 = vshrl.u32 %v599, 7
    %v601 = vsub.s32 6, %v600
    %v602 = vrot.slane %v386, %v601
    %v603 = vlaneseq
    %v604 = vshrl.u32 %v603, 7
    %v605 = vsub.s32 7, %v604
    %v606 = vrot.slane %v386, %v605
    %v607 = vlaneseq
    %v608 = vshrl.u32 %v607, 7
    %v609 = vsub.s32 0, %v608
    %v610 = vrot.slane %v388, %v609
    %v611 = vlaneseq
    %v612 = vshrl.u32 %v611, 7
    %v613 = vsub.s32 1, %v612
    %v614 = vrot.slane %v388, %v613
    %v625 = vmul.f32 %v60, %v578
    %v626 = vmul.f32 %v61, %v582
    %v627 = vmul.f32 %v62, %v586
    %v628 = vmul.f32 %v63, %v590
    %v629 = vmul.f32 %v64, %v594
    %v630 = vmul.f32 %v65, %v598
    %v631 = vmul.f32 %v66, %v602
    %v632 = vmul.f32 %v67, %v606
    %v633 = vmul.f32 %v68, %v610
    %v634 = vmul.f32 %v69, %v614
    %v635 = vmul.f32 %v70, %v578
    %v636 = vmul.f32 %v71, %v582
    %v637 = vmul.f32 %v72, %v586
    %v638 = vmul.f32 %v73, %v590
    %v639 = vmul.f32 %v74, %v594
    %v640 = vmul.f32 %v75, %v598
    %v641 = vmul.f32 %v76, %v602
    %v642 = vmul.f32 %v77, %v606
    %v643 = vmul.f32 %v78, %v610
    %v644 = vmul.f32 %v79, %v614
    %v645 = vadd.f32 %v625, %v626
    %v646 = vadd.f32 %v645, %v627
    %v647 = vadd.f32 %v646, %v628
    %v648 = vadd.f32 %v647, %v629
    %v649 = vadd.f32 %v648, %v630
    %v650 = vadd.f32 %v649, %v631
    %v651 = vadd.f32 %v650, %v632
    %v652 = vadd.f32 %v651, %v633
    %v653 = vadd.f32 %v652, %v634
    %654 = vadd.xlane.f32.xlu0 %v653
    %v655 = vpop.xlane.xlu0 %654
    %v656 = vadd.f32 %v635, %v636
    %v657 = vadd.f32 %v656, %v637
    %v658 = vadd.f32 %v657, %v638
    %v659 = vadd.f32 %v658, %v639
    %v660 = vadd.f32 %v659, %v640
    %v661 = vadd.f32 %v660, %v641
    %v662 = vadd.f32 %v661, %v642
    %v663 = vadd.f32 %v662, %v643
    %v664 = vadd.f32 %v663, %v644
    %665 = vadd.xlane.f32.xlu0 %v664
    %v666 = vpop.xlane.xlu0 %665
    %v667 = vld [vmem:[%s3 + $0x1] sm:$0x1]
    %v668 = vlaneseq
    %v669 = vshrl.u32 %v668, 7
    %v670 = vsub.s32 0, %v669
    %v671 = vrot.slane %v667, %v670
    %v672 = vadd.f32 %v655, %v671
    %v673 = vadd.f32 %v666, %v671
    %s674 = scalar_lea.vmem [#allocation4], 2
    %v675 = vld [vmem:[%s674] ss:$8 sm:$0xf]
    %v676 = vld [vmem:[%s674] ss:$8 sm:$0xf0]
    %v677 = vor.u32 %v675, %v676
    %s678 = scalar_lea.vmem [#allocation4], 66
    %v679 = vld [vmem:[%s678] ss:$8 sm:$0x3]
    %s680 = scalar_lea.vmem [#allocation6], 2
    %v681 = vld [vmem:[%s680] ss:$8 sm:$0xf]
    %v682 = vld [vmem:[%s680] ss:$8 sm:$0xf0]
    %v683 = vor.u32 %v681, %v682
    %s684 = scalar_lea.vmem [#allocation6], 66
    %v685 = vld [vmem:[%s684] ss:$8 sm:$0x3]
    %v688 = vlaneseq
    %v689 = vshrl.u32 %v688, 7
    %v690 = vsub.s32 0, %v689
    %v691 = vrot.slane %v677, %v690
    %v692 = vlaneseq
    %v693 = vshrl.u32 %v692, 7
    %v694 = vsub.s32 1, %v693
    %v695 = vrot.slane %v677, %v694
    %v696 = vlaneseq
    %v697 = vshrl.u32 %v696, 7
    %v698 = vsub.s32 2, %v697
    %v699 = vrot.slane %v677, %v698
    %v700 = vlaneseq
    %v701 = vshrl.u32 %v700, 7
    %v702 = vsub.s32 3, %v701
    %v703 = vrot.slane %v677, %v702
    %v704 = vlaneseq
    %v705 = vshrl.u32 %v704, 7
    %v706 = vsub.s32 4, %v705
    %v707 = vrot.slane %v677, %v706
    %v708 = vlaneseq
    %v709 = vshrl.u32 %v708, 7
    %v710 = vsub.s32 5, %v709
    %v711 = vrot.slane %v677, %v710
    %v712 = vlaneseq
    %v713 = vshrl.u32 %v712, 7
    %v714 = vsub.s32 6, %v713
    %v715 = vrot.slane %v677, %v714
    %v716 = vlaneseq
    %v717 = vshrl.u32 %v716, 7
    %v718 = vsub.s32 7, %v717
    %v719 = vrot.slane %v677, %v718
    %v720 = vlaneseq
    %v721 = vshrl.u32 %v720, 7
    %v722 = vsub.s32 0, %v721
    %v723 = vrot.slane %v679, %v722
    %v724 = vlaneseq
    %v725 = vshrl.u32 %v724, 7
    %v726 = vsub.s32 1, %v725
    %v727 = vrot.slane %v679, %v726
    %v738 = vsub.f32 %v60, %v691
    %v739 = vsub.f32 %v61, %v695
    %v740 = vsub.f32 %v62, %v699
    %v741 = vsub.f32 %v63, %v703
    %v742 = vsub.f32 %v64, %v707
    %v743 = vsub.f32 %v65, %v711
    %v744 = vsub.f32 %v66, %v715
    %v745 = vsub.f32 %v67, %v719
    %v746 = vsub.f32 %v68, %v723
    %v747 = vsub.f32 %v69, %v727
    %v748 = vsub.f32 %v70, %v691
    %v749 = vsub.f32 %v71, %v695
    %v750 = vsub.f32 %v72, %v699
    %v751 = vsub.f32 %v73, %v703
    %v752 = vsub.f32 %v74, %v707
    %v753 = vsub.f32 %v75, %v711
    %v754 = vsub.f32 %v76, %v715
    %v755 = vsub.f32 %v77, %v719
    %v756 = vsub.f32 %v78, %v723
    %v757 = vsub.f32 %v79, %v727
    %v758 = vmul.f32 %v738, %v738
    %v759 = vmul.f32 %v739, %v739
    %v760 = vmul.f32 %v740, %v740
    %v761 = vmul.f32 %v741, %v741
    %v762 = vmul.f32 %v742, %v742
    %v763 = vmul.f32 %v743, %v743
    %v764 = vmul.f32 %v744, %v744
    %v765 = vmul.f32 %v745, %v745
    %v766 = vmul.f32 %v746, %v746
    %v767 = vmul.f32 %v747, %v747
    %v768 = vmul.f32 %v748, %v748
    %v769 = vmul.f32 %v749, %v749
    %v770 = vmul.f32 %v750, %v750
    %v771 = vmul.f32 %v751, %v751
    %v772 = vmul.f32 %v752, %v752
    %v773 = vmul.f32 %v753, %v753
    %v774 = vmul.f32 %v754, %v754
    %v775 = vmul.f32 %v755, %v755
    %v776 = vmul.f32 %v756, %v756
    %v777 = vmul.f32 %v757, %v757
    %v778 = vmax.f32 %v758, 1e-12
    %v779 = vmax.f32 %v759, 1e-12
    %v780 = vmax.f32 %v760, 1e-12
    %v781 = vmax.f32 %v761, 1e-12
    %v782 = vmax.f32 %v762, 1e-12
    %v783 = vmax.f32 %v763, 1e-12
    %v784 = vmax.f32 %v764, 1e-12
    %v785 = vmax.f32 %v765, 1e-12
    %v786 = vmax.f32 %v766, 1e-12
    %v787 = vmax.f32 %v767, 1e-12
    %v788 = vmax.f32 %v768, 1e-12
    %v789 = vmax.f32 %v769, 1e-12
    %v790 = vmax.f32 %v770, 1e-12
    %v791 = vmax.f32 %v771, 1e-12
    %v792 = vmax.f32 %v772, 1e-12
    %v793 = vmax.f32 %v773, 1e-12
    %v794 = vmax.f32 %v774, 1e-12
    %v795 = vmax.f32 %v775, 1e-12
    %v796 = vmax.f32 %v776, 1e-12
    %v797 = vmax.f32 %v777, 1e-12
    %v798 = vmin.f32 %v778, 1e+12
    %v799 = vmin.f32 %v779, 1e+12
    %v800 = vmin.f32 %v780, 1e+12
    %v801 = vmin.f32 %v781, 1e+12
    %v802 = vmin.f32 %v782, 1e+12
    %v803 = vmin.f32 %v783, 1e+12
    %v804 = vmin.f32 %v784, 1e+12
    %v805 = vmin.f32 %v785, 1e+12
    %v806 = vmin.f32 %v786, 1e+12
    %v807 = vmin.f32 %v787, 1e+12
    %v808 = vmin.f32 %v788, 1e+12
    %v809 = vmin.f32 %v789, 1e+12
    %v810 = vmin.f32 %v790, 1e+12
    %v811 = vmin.f32 %v791, 1e+12
    %v812 = vmin.f32 %v792, 1e+12
    %v813 = vmin.f32 %v793, 1e+12
    %v814 = vmin.f32 %v794, 1e+12
    %v815 = vmin.f32 %v795, 1e+12
    %v816 = vmin.f32 %v796, 1e+12
    %v817 = vmin.f32 %v797, 1e+12
    %v818 = vadd.f32 %v521, %v798
    %v819 = vadd.f32 %v522, %v799
    %v820 = vadd.f32 %v523, %v800
    %v821 = vadd.f32 %v524, %v801
    %v822 = vadd.f32 %v525, %v802
    %v823 = vadd.f32 %v526, %v803
    %v824 = vadd.f32 %v527, %v804
    %v825 = vadd.f32 %v528, %v805
    %v826 = vadd.f32 %v529, %v806
    %v827 = vadd.f32 %v530, %v807
    %v828 = vadd.f32 %v531, %v808
    %v829 = vadd.f32 %v532, %v809
    %v830 = vadd.f32 %v533, %v810
    %v831 = vadd.f32 %v534, %v811
    %v832 = vadd.f32 %v535, %v812
    %v833 = vadd.f32 %v536, %v813
    %v834 = vadd.f32 %v537, %v814
    %v835 = vadd.f32 %v538, %v815
    %v836 = vadd.f32 %v539, %v816
    %v837 = vadd.f32 %v540, %v817
    %vm838 = vcmp.eq.s32.totalorder %v80, 2
    %vm839 = vcmp.eq.s32.totalorder %v81, 2
    %v840 = vsel %vm838, 1, 0
    %v841 = vsel %vm839, 1, 0
    %842 = vset.pattern.permute.xlu0 0
    %843 = vperm.xlu0 %842, %v840
    %v844 = vpop.permute.xlu0 %843
    %845 = vset.pattern.permute.xlu0 0
    %846 = vperm.xlu0 %845, %v841
    %v847 = vpop.permute.xlu0 %846
    %vm848 = vcmp.eq.s32.totalorder %v844, 1
    %vm849 = vcmp.eq.s32.totalorder %v847, 1
    %v850 = vsel %vm848, %v798, %v553
    %v851 = vsel %vm848, %v799, %v554
    %v852 = vsel %vm848, %v800, %v555
    %v853 = vsel %vm848, %v801, %v556
    %v854 = vsel %vm848, %v802, %v557
    %v855 = vsel %vm848, %v803, %v558
    %v856 = vsel %vm848, %v804, %v559
    %v857 = vsel %vm848, %v805, %v560
    %v858 = vsel %vm848, %v806, %v561
    %v859 = vsel %vm848, %v807, %v562
    %v860 = vsel %vm849, %v808, %v563
    %v861 = vsel %vm849, %v809, %v564
    %v862 = vsel %vm849, %v810, %v565
    %v863 = vsel %vm849, %v811, %v566
    %v864 = vsel %vm849, %v812, %v567
    %v865 = vsel %vm849, %v813, %v568
    %v866 = vsel %vm849, %v814, %v569
    %v867 = vsel %vm849, %v815, %v570
    %v868 = vsel %vm849, %v816, %v571
    %v869 = vsel %vm849, %v817, %v572
    %v872 = vlaneseq
    %v873 = vshrl.u32 %v872, 7
    %v874 = vsub.s32 0, %v873
    %v875 = vrot.slane %v683, %v874
    %v876 = vlaneseq
    %v877 = vshrl.u32 %v876, 7
    %v878 = vsub.s32 1, %v877
    %v879 = vrot.slane %v683, %v878
    %v880 = vlaneseq
    %v881 = vshrl.u32 %v880, 7
    %v882 = vsub.s32 2, %v881
    %v883 = vrot.slane %v683, %v882
    %v884 = vlaneseq
    %v885 = vshrl.u32 %v884, 7
    %v886 = vsub.s32 3, %v885
    %v887 = vrot.slane %v683, %v886
    %v888 = vlaneseq
    %v889 = vshrl.u32 %v888, 7
    %v890 = vsub.s32 4, %v889
    %v891 = vrot.slane %v683, %v890
    %v892 = vlaneseq
    %v893 = vshrl.u32 %v892, 7
    %v894 = vsub.s32 5, %v893
    %v895 = vrot.slane %v683, %v894
    %v896 = vlaneseq
    %v897 = vshrl.u32 %v896, 7
    %v898 = vsub.s32 6, %v897
    %v899 = vrot.slane %v683, %v898
    %v900 = vlaneseq
    %v901 = vshrl.u32 %v900, 7
    %v902 = vsub.s32 7, %v901
    %v903 = vrot.slane %v683, %v902
    %v904 = vlaneseq
    %v905 = vshrl.u32 %v904, 7
    %v906 = vsub.s32 0, %v905
    %v907 = vrot.slane %v685, %v906
    %v908 = vlaneseq
    %v909 = vshrl.u32 %v908, 7
    %v910 = vsub.s32 1, %v909
    %v911 = vrot.slane %v685, %v910
    %v922 = vmul.f32 %v60, %v875
    %v923 = vmul.f32 %v61, %v879
    %v924 = vmul.f32 %v62, %v883
    %v925 = vmul.f32 %v63, %v887
    %v926 = vmul.f32 %v64, %v891
    %v927 = vmul.f32 %v65, %v895
    %v928 = vmul.f32 %v66, %v899
    %v929 = vmul.f32 %v67, %v903
    %v930 = vmul.f32 %v68, %v907
    %v931 = vmul.f32 %v69, %v911
    %v932 = vmul.f32 %v70, %v875
    %v933 = vmul.f32 %v71, %v879
    %v934 = vmul.f32 %v72, %v883
    %v935 = vmul.f32 %v73, %v887
    %v936 = vmul.f32 %v74, %v891
    %v937 = vmul.f32 %v75, %v895
    %v938 = vmul.f32 %v76, %v899
    %v939 = vmul.f32 %v77, %v903
    %v940 = vmul.f32 %v78, %v907
    %v941 = vmul.f32 %v79, %v911
    %v942 = vadd.f32 %v922, %v923
    %v943 = vadd.f32 %v942, %v924
    %v944 = vadd.f32 %v943, %v925
    %v945 = vadd.f32 %v944, %v926
    %v946 = vadd.f32 %v945, %v927
    %v947 = vadd.f32 %v946, %v928
    %v948 = vadd.f32 %v947, %v929
    %v949 = vadd.f32 %v948, %v930
    %v950 = vadd.f32 %v949, %v931
    %951 = vadd.xlane.f32.xlu0 %v950
    %v952 = vpop.xlane.xlu0 %951
    %v953 = vadd.f32 %v932, %v933
    %v954 = vadd.f32 %v953, %v934
    %v955 = vadd.f32 %v954, %v935
    %v956 = vadd.f32 %v955, %v936
    %v957 = vadd.f32 %v956, %v937
    %v958 = vadd.f32 %v957, %v938
    %v959 = vadd.f32 %v958, %v939
    %v960 = vadd.f32 %v959, %v940
    %v961 = vadd.f32 %v960, %v941
    %962 = vadd.xlane.f32.xlu0 %v961
    %v963 = vpop.xlane.xlu0 %962
    %v964 = vld [vmem:[%s3 + $0x2] sm:$0x1]
    %v965 = vlaneseq
    %v966 = vshrl.u32 %v965, 7
    %v967 = vsub.s32 0, %v966
    %v968 = vrot.slane %v964, %v967
    %v969 = vadd.f32 %v952, %v968
    %v970 = vadd.f32 %v963, %v968
    %s971 = scalar_lea.vmem [#allocation4], 3
    %v972 = vld [vmem:[%s971] ss:$8 sm:$0xf]
    %v973 = vld [vmem:[%s971] ss:$8 sm:$0xf0]
    %v974 = vor.u32 %v972, %v973
    %s975 = scalar_lea.vmem [#allocation4], 67
    %v976 = vld [vmem:[%s975] ss:$8 sm:$0x3]
    %s977 = scalar_lea.vmem [#allocation6], 3
    %v978 = vld [vmem:[%s977] ss:$8 sm:$0xf]
    %v979 = vld [vmem:[%s977] ss:$8 sm:$0xf0]
    %v980 = vor.u32 %v978, %v979
    %s981 = scalar_lea.vmem [#allocation6], 67
    %v982 = vld [vmem:[%s981] ss:$8 sm:$0x3]
    %v985 = vlaneseq
    %v986 = vshrl.u32 %v985, 7
    %v987 = vsub.s32 0, %v986
    %v988 = vrot.slane %v974, %v987
    %v989 = vlaneseq
    %v990 = vshrl.u32 %v989, 7
    %v991 = vsub.s32 1, %v990
    %v992 = vrot.slane %v974, %v991
    %v993 = vlaneseq
    %v994 = vshrl.u32 %v993, 7
    %v995 = vsub.s32 2, %v994
    %v996 = vrot.slane %v974, %v995
    %v997 = vlaneseq
    %v998 = vshrl.u32 %v997, 7
    %v999 = vsub.s32 3, %v998
    %v1000 = vrot.slane %v974, %v999
    %v1001 = vlaneseq
    %v1002 = vshrl.u32 %v1001, 7
    %v1003 = vsub.s32 4, %v1002
    %v1004 = vrot.slane %v974, %v1003
    %v1005 = vlaneseq
    %v1006 = vshrl.u32 %v1005, 7
    %v1007 = vsub.s32 5, %v1006
    %v1008 = vrot.slane %v974, %v1007
    %v1009 = vlaneseq
    %v1010 = vshrl.u32 %v1009, 7
    %v1011 = vsub.s32 6, %v1010
    %v1012 = vrot.slane %v974, %v1011
    %v1013 = vlaneseq
    %v1014 = vshrl.u32 %v1013, 7
    %v1015 = vsub.s32 7, %v1014
    %v1016 = vrot.slane %v974, %v1015
    %v1017 = vlaneseq
    %v1018 = vshrl.u32 %v1017, 7
    %v1019 = vsub.s32 0, %v1018
    %v1020 = vrot.slane %v976, %v1019
    %v1021 = vlaneseq
    %v1022 = vshrl.u32 %v1021, 7
    %v1023 = vsub.s32 1, %v1022
    %v1024 = vrot.slane %v976, %v1023
    %v1035 = vsub.f32 %v60, %v988
    %v1036 = vsub.f32 %v61, %v992
    %v1037 = vsub.f32 %v62, %v996
    %v1038 = vsub.f32 %v63, %v1000
    %v1039 = vsub.f32 %v64, %v1004
    %v1040 = vsub.f32 %v65, %v1008
    %v1041 = vsub.f32 %v66, %v1012
    %v1042 = vsub.f32 %v67, %v1016
    %v1043 = vsub.f32 %v68, %v1020
    %v1044 = vsub.f32 %v69, %v1024
    %v1045 = vsub.f32 %v70, %v988
    %v1046 = vsub.f32 %v71, %v992
    %v1047 = vsub.f32 %v72, %v996
    %v1048 = vsub.f32 %v73, %v1000
    %v1049 = vsub.f32 %v74, %v1004
    %v1050 = vsub.f32 %v75, %v1008
    %v1051 = vsub.f32 %v76, %v1012
    %v1052 = vsub.f32 %v77, %v1016
    %v1053 = vsub.f32 %v78, %v1020
    %v1054 = vsub.f32 %v79, %v1024
    %v1055 = vmul.f32 %v1035, %v1035
    %v1056 = vmul.f32 %v1036, %v1036
    %v1057 = vmul.f32 %v1037, %v1037
    %v1058 = vmul.f32 %v1038, %v1038
    %v1059 = vmul.f32 %v1039, %v1039
    %v1060 = vmul.f32 %v1040, %v1040
    %v1061 = vmul.f32 %v1041, %v1041
    %v1062 = vmul.f32 %v1042, %v1042
    %v1063 = vmul.f32 %v1043, %v1043
    %v1064 = vmul.f32 %v1044, %v1044
    %v1065 = vmul.f32 %v1045, %v1045
    %v1066 = vmul.f32 %v1046, %v1046
    %v1067 = vmul.f32 %v1047, %v1047
    %v1068 = vmul.f32 %v1048, %v1048
    %v1069 = vmul.f32 %v1049, %v1049
    %v1070 = vmul.f32 %v1050, %v1050
    %v1071 = vmul.f32 %v1051, %v1051
    %v1072 = vmul.f32 %v1052, %v1052
    %v1073 = vmul.f32 %v1053, %v1053
    %v1074 = vmul.f32 %v1054, %v1054
    %v1075 = vmax.f32 %v1055, 1e-12
    %v1076 = vmax.f32 %v1056, 1e-12
    %v1077 = vmax.f32 %v1057, 1e-12
    %v1078 = vmax.f32 %v1058, 1e-12
    %v1079 = vmax.f32 %v1059, 1e-12
    %v1080 = vmax.f32 %v1060, 1e-12
    %v1081 = vmax.f32 %v1061, 1e-12
    %v1082 = vmax.f32 %v1062, 1e-12
    %v1083 = vmax.f32 %v1063, 1e-12
    %v1084 = vmax.f32 %v1064, 1e-12
    %v1085 = vmax.f32 %v1065, 1e-12
    %v1086 = vmax.f32 %v1066, 1e-12
    %v1087 = vmax.f32 %v1067, 1e-12
    %v1088 = vmax.f32 %v1068, 1e-12
    %v1089 = vmax.f32 %v1069, 1e-12
    %v1090 = vmax.f32 %v1070, 1e-12
    %v1091 = vmax.f32 %v1071, 1e-12
    %v1092 = vmax.f32 %v1072, 1e-12
    %v1093 = vmax.f32 %v1073, 1e-12
    %v1094 = vmax.f32 %v1074, 1e-12
    %v1095 = vmin.f32 %v1075, 1e+12
    %v1096 = vmin.f32 %v1076, 1e+12
    %v1097 = vmin.f32 %v1077, 1e+12
    %v1098 = vmin.f32 %v1078, 1e+12
    %v1099 = vmin.f32 %v1079, 1e+12
    %v1100 = vmin.f32 %v1080, 1e+12
    %v1101 = vmin.f32 %v1081, 1e+12
    %v1102 = vmin.f32 %v1082, 1e+12
    %v1103 = vmin.f32 %v1083, 1e+12
    %v1104 = vmin.f32 %v1084, 1e+12
    %v1105 = vmin.f32 %v1085, 1e+12
    %v1106 = vmin.f32 %v1086, 1e+12
    %v1107 = vmin.f32 %v1087, 1e+12
    %v1108 = vmin.f32 %v1088, 1e+12
    %v1109 = vmin.f32 %v1089, 1e+12
    %v1110 = vmin.f32 %v1090, 1e+12
    %v1111 = vmin.f32 %v1091, 1e+12
    %v1112 = vmin.f32 %v1092, 1e+12
    %v1113 = vmin.f32 %v1093, 1e+12
    %v1114 = vmin.f32 %v1094, 1e+12
    %v1115 = vadd.f32 %v818, %v1095
    %v1116 = vadd.f32 %v819, %v1096
    %v1117 = vadd.f32 %v820, %v1097
    %v1118 = vadd.f32 %v821, %v1098
    %v1119 = vadd.f32 %v822, %v1099
    %v1120 = vadd.f32 %v823, %v1100
    %v1121 = vadd.f32 %v824, %v1101
    %v1122 = vadd.f32 %v825, %v1102
    %v1123 = vadd.f32 %v826, %v1103
    %v1124 = vadd.f32 %v827, %v1104
    %v1125 = vadd.f32 %v828, %v1105
    %v1126 = vadd.f32 %v829, %v1106
    %v1127 = vadd.f32 %v830, %v1107
    %v1128 = vadd.f32 %v831, %v1108
    %v1129 = vadd.f32 %v832, %v1109
    %v1130 = vadd.f32 %v833, %v1110
    %v1131 = vadd.f32 %v834, %v1111
    %v1132 = vadd.f32 %v835, %v1112
    %v1133 = vadd.f32 %v836, %v1113
    %v1134 = vadd.f32 %v837, %v1114
    %vm1135 = vcmp.eq.s32.totalorder %v80, 3
    %vm1136 = vcmp.eq.s32.totalorder %v81, 3
    %v1137 = vsel %vm1135, 1, 0
    %v1138 = vsel %vm1136, 1, 0
    %1139 = vset.pattern.permute.xlu0 0
    %1140 = vperm.xlu0 %1139, %v1137
    %v1141 = vpop.permute.xlu0 %1140
    %1142 = vset.pattern.permute.xlu0 0
    %1143 = vperm.xlu0 %1142, %v1138
    %v1144 = vpop.permute.xlu0 %1143
    %vm1145 = vcmp.eq.s32.totalorder %v1141, 1
    %vm1146 = vcmp.eq.s32.totalorder %v1144, 1
    %v1147 = vsel %vm1145, %v1095, %v850
    %v1148 = vsel %vm1145, %v1096, %v851
    %v1149 = vsel %vm1145, %v1097, %v852
    %v1150 = vsel %vm1145, %v1098, %v853
    %v1151 = vsel %vm1145, %v1099, %v854
    %v1152 = vsel %vm1145, %v1100, %v855
    %v1153 = vsel %vm1145, %v1101, %v856
    %v1154 = vsel %vm1145, %v1102, %v857
    %v1155 = vsel %vm1145, %v1103, %v858
    %v1156 = vsel %vm1145, %v1104, %v859
    %v1157 = vsel %vm1146, %v1105, %v860
    %v1158 = vsel %vm1146, %v1106, %v861
    %v1159 = vsel %vm1146, %v1107, %v862
    %v1160 = vsel %vm1146, %v1108, %v863
    %v1161 = vsel %vm1146, %v1109, %v864
    %v1162 = vsel %vm1146, %v1110, %v865
    %v1163 = vsel %vm1146, %v1111, %v866
    %v1164 = vsel %vm1146, %v1112, %v867
    %v1165 = vsel %vm1146, %v1113, %v868
    %v1166 = vsel %vm1146, %v1114, %v869
    %v1169 = vlaneseq
    %v1170 = vshrl.u32 %v1169, 7
    %v1171 = vsub.s32 0, %v1170
    %v1172 = vrot.slane %v980, %v1171
    %v1173 = vlaneseq
    %v1174 = vshrl.u32 %v1173, 7
    %v1175 = vsub.s32 1, %v1174
    %v1176 = vrot.slane %v980, %v1175
    %v1177 = vlaneseq
    %v1178 = vshrl.u32 %v1177, 7
    %v1179 = vsub.s32 2, %v1178
    %v1180 = vrot.slane %v980, %v1179
    %v1181 = vlaneseq
    %v1182 = vshrl.u32 %v1181, 7
    %v1183 = vsub.s32 3, %v1182
    %v1184 = vrot.slane %v980, %v1183
    %v1185 = vlaneseq
    %v1186 = vshrl.u32 %v1185, 7
    %v1187 = vsub.s32 4, %v1186
    %v1188 = vrot.slane %v980, %v1187
    %v1189 = vlaneseq
    %v1190 = vshrl.u32 %v1189, 7
    %v1191 = vsub.s32 5, %v1190
    %v1192 = vrot.slane %v980, %v1191
    %v1193 = vlaneseq
    %v1194 = vshrl.u32 %v1193, 7
    %v1195 = vsub.s32 6, %v1194
    %v1196 = vrot.slane %v980, %v1195
    %v1197 = vlaneseq
    %v1198 = vshrl.u32 %v1197, 7
    %v1199 = vsub.s32 7, %v1198
    %v1200 = vrot.slane %v980, %v1199
    %v1201 = vlaneseq
    %v1202 = vshrl.u32 %v1201, 7
    %v1203 = vsub.s32 0, %v1202
    %v1204 = vrot.slane %v982, %v1203
    %v1205 = vlaneseq
    %v1206 = vshrl.u32 %v1205, 7
    %v1207 = vsub.s32 1, %v1206
    %v1208 = vrot.slane %v982, %v1207
    %v1219 = vmul.f32 %v60, %v1172
    %v1220 = vmul.f32 %v61, %v1176
    %v1221 = vmul.f32 %v62, %v1180
    %v1222 = vmul.f32 %v63, %v1184
    %v1223 = vmul.f32 %v64, %v1188
    %v1224 = vmul.f32 %v65, %v1192
    %v1225 = vmul.f32 %v66, %v1196
    %v1226 = vmul.f32 %v67, %v1200
    %v1227 = vmul.f32 %v68, %v1204
    %v1228 = vmul.f32 %v69, %v1208
    %v1229 = vmul.f32 %v70, %v1172
    %v1230 = vmul.f32 %v71, %v1176
    %v1231 = vmul.f32 %v72, %v1180
    %v1232 = vmul.f32 %v73, %v1184
    %v1233 = vmul.f32 %v74, %v1188
    %v1234 = vmul.f32 %v75, %v1192
    %v1235 = vmul.f32 %v76, %v1196
    %v1236 = vmul.f32 %v77, %v1200
    %v1237 = vmul.f32 %v78, %v1204
    %v1238 = vmul.f32 %v79, %v1208
    %v1239 = vadd.f32 %v1219, %v1220
    %v1240 = vadd.f32 %v1239, %v1221
    %v1241 = vadd.f32 %v1240, %v1222
    %v1242 = vadd.f32 %v1241, %v1223
    %v1243 = vadd.f32 %v1242, %v1224
    %v1244 = vadd.f32 %v1243, %v1225
    %v1245 = vadd.f32 %v1244, %v1226
    %v1246 = vadd.f32 %v1245, %v1227
    %v1247 = vadd.f32 %v1246, %v1228
    %1248 = vadd.xlane.f32.xlu0 %v1247
    %v1249 = vpop.xlane.xlu0 %1248
    %v1250 = vadd.f32 %v1229, %v1230
    %v1251 = vadd.f32 %v1250, %v1231
    %v1252 = vadd.f32 %v1251, %v1232
    %v1253 = vadd.f32 %v1252, %v1233
    %v1254 = vadd.f32 %v1253, %v1234
    %v1255 = vadd.f32 %v1254, %v1235
    %v1256 = vadd.f32 %v1255, %v1236
    %v1257 = vadd.f32 %v1256, %v1237
    %v1258 = vadd.f32 %v1257, %v1238
    %1259 = vadd.xlane.f32.xlu0 %v1258
    %v1260 = vpop.xlane.xlu0 %1259
    %v1261 = vld [vmem:[%s3 + $0x3] sm:$0x1]
    %v1262 = vlaneseq
    %v1263 = vshrl.u32 %v1262, 7
    %v1264 = vsub.s32 0, %v1263
    %v1265 = vrot.slane %v1261, %v1264
    %v1266 = vadd.f32 %v1249, %v1265
    %v1267 = vadd.f32 %v1260, %v1265
    %s1268 = scalar_lea.vmem [#allocation4], 4
    %v1269 = vld [vmem:[%s1268] ss:$8 sm:$0xf]
    %v1270 = vld [vmem:[%s1268] ss:$8 sm:$0xf0]
    %v1271 = vor.u32 %v1269, %v1270
    %s1272 = scalar_lea.vmem [#allocation4], 68
    %v1273 = vld [vmem:[%s1272] ss:$8 sm:$0x3]
    %s1274 = scalar_lea.vmem [#allocation6], 4
    %v1275 = vld [vmem:[%s1274] ss:$8 sm:$0xf]
    %v1276 = vld [vmem:[%s1274] ss:$8 sm:$0xf0]
    %v1277 = vor.u32 %v1275, %v1276
    %s1278 = scalar_lea.vmem [#allocation6], 68
    %v1279 = vld [vmem:[%s1278] ss:$8 sm:$0x3]
    %v1282 = vlaneseq
    %v1283 = vshrl.u32 %v1282, 7
    %v1284 = vsub.s32 0, %v1283
    %v1285 = vrot.slane %v1271, %v1284
    %v1286 = vlaneseq
    %v1287 = vshrl.u32 %v1286, 7
    %v1288 = vsub.s32 1, %v1287
    %v1289 = vrot.slane %v1271, %v1288
    %v1290 = vlaneseq
    %v1291 = vshrl.u32 %v1290, 7
    %v1292 = vsub.s32 2, %v1291
    %v1293 = vrot.slane %v1271, %v1292
    %v1294 = vlaneseq
    %v1295 = vshrl.u32 %v1294, 7
    %v1296 = vsub.s32 3, %v1295
    %v1297 = vrot.slane %v1271, %v1296
    %v1298 = vlaneseq
    %v1299 = vshrl.u32 %v1298, 7
    %v1300 = vsub.s32 4, %v1299
    %v1301 = vrot.slane %v1271, %v1300
    %v1302 = vlaneseq
    %v1303 = vshrl.u32 %v1302, 7
    %v1304 = vsub.s32 5, %v1303
    %v1305 = vrot.slane %v1271, %v1304
    %v1306 = vlaneseq
    %v1307 = vshrl.u32 %v1306, 7
    %v1308 = vsub.s32 6, %v1307
    %v1309 = vrot.slane %v1271, %v1308
    %v1310 = vlaneseq
    %v1311 = vshrl.u32 %v1310, 7
    %v1312 = vsub.s32 7, %v1311
    %v1313 = vrot.slane %v1271, %v1312
    %v1314 = vlaneseq
    %v1315 = vshrl.u32 %v1314, 7
    %v1316 = vsub.s32 0, %v1315
    %v1317 = vrot.slane %v1273, %v1316
    %v1318 = vlaneseq
    %v1319 = vshrl.u32 %v1318, 7
    %v1320 = vsub.s32 1, %v1319
    %v1321 = vrot.slane %v1273, %v1320
    %v1332 = vsub.f32 %v60, %v1285
    %v1333 = vsub.f32 %v61, %v1289
    %v1334 = vsub.f32 %v62, %v1293
    %v1335 = vsub.f32 %v63, %v1297
    %v1336 = vsub.f32 %v64, %v1301
    %v1337 = vsub.f32 %v65, %v1305
    %v1338 = vsub.f32 %v66, %v1309
    %v1339 = vsub.f32 %v67, %v1313
    %v1340 = vsub.f32 %v68, %v1317
    %v1341 = vsub.f32 %v69, %v1321
    %v1342 = vsub.f32 %v70, %v1285
    %v1343 = vsub.f32 %v71, %v1289
    %v1344 = vsub.f32 %v72, %v1293
    %v1345 = vsub.f32 %v73, %v1297
    %v1346 = vsub.f32 %v74, %v1301
    %v1347 = vsub.f32 %v75, %v1305
    %v1348 = vsub.f32 %v76, %v1309
    %v1349 = vsub.f32 %v77, %v1313
    %v1350 = vsub.f32 %v78, %v1317
    %v1351 = vsub.f32 %v79, %v1321
    %v1352 = vmul.f32 %v1332, %v1332
    %v1353 = vmul.f32 %v1333, %v1333
    %v1354 = vmul.f32 %v1334, %v1334
    %v1355 = vmul.f32 %v1335, %v1335
    %v1356 = vmul.f32 %v1336, %v1336
    %v1357 = vmul.f32 %v1337, %v1337
    %v1358 = vmul.f32 %v1338, %v1338
    %v1359 = vmul.f32 %v1339, %v1339
    %v1360 = vmul.f32 %v1340, %v1340
    %v1361 = vmul.f32 %v1341, %v1341
    %v1362 = vmul.f32 %v1342, %v1342
    %v1363 = vmul.f32 %v1343, %v1343
    %v1364 = vmul.f32 %v1344, %v1344
    %v1365 = vmul.f32 %v1345, %v1345
    %v1366 = vmul.f32 %v1346, %v1346
    %v1367 = vmul.f32 %v1347, %v1347
    %v1368 = vmul.f32 %v1348, %v1348
    %v1369 = vmul.f32 %v1349, %v1349
    %v1370 = vmul.f32 %v1350, %v1350
    %v1371 = vmul.f32 %v1351, %v1351
    %v1372 = vmax.f32 %v1352, 1e-12
    %v1373 = vmax.f32 %v1353, 1e-12
    %v1374 = vmax.f32 %v1354, 1e-12
    %v1375 = vmax.f32 %v1355, 1e-12
    %v1376 = vmax.f32 %v1356, 1e-12
    %v1377 = vmax.f32 %v1357, 1e-12
    %v1378 = vmax.f32 %v1358, 1e-12
    %v1379 = vmax.f32 %v1359, 1e-12
    %v1380 = vmax.f32 %v1360, 1e-12
    %v1381 = vmax.f32 %v1361, 1e-12
    %v1382 = vmax.f32 %v1362, 1e-12
    %v1383 = vmax.f32 %v1363, 1e-12
    %v1384 = vmax.f32 %v1364, 1e-12
    %v1385 = vmax.f32 %v1365, 1e-12
    %v1386 = vmax.f32 %v1366, 1e-12
    %v1387 = vmax.f32 %v1367, 1e-12
    %v1388 = vmax.f32 %v1368, 1e-12
    %v1389 = vmax.f32 %v1369, 1e-12
    %v1390 = vmax.f32 %v1370, 1e-12
    %v1391 = vmax.f32 %v1371, 1e-12
    %v1392 = vmin.f32 %v1372, 1e+12
    %v1393 = vmin.f32 %v1373, 1e+12
    %v1394 = vmin.f32 %v1374, 1e+12
    %v1395 = vmin.f32 %v1375, 1e+12
    %v1396 = vmin.f32 %v1376, 1e+12
    %v1397 = vmin.f32 %v1377, 1e+12
    %v1398 = vmin.f32 %v1378, 1e+12
    %v1399 = vmin.f32 %v1379, 1e+12
    %v1400 = vmin.f32 %v1380, 1e+12
    %v1401 = vmin.f32 %v1381, 1e+12
    %v1402 = vmin.f32 %v1382, 1e+12
    %v1403 = vmin.f32 %v1383, 1e+12
    %v1404 = vmin.f32 %v1384, 1e+12
    %v1405 = vmin.f32 %v1385, 1e+12
    %v1406 = vmin.f32 %v1386, 1e+12
    %v1407 = vmin.f32 %v1387, 1e+12
    %v1408 = vmin.f32 %v1388, 1e+12
    %v1409 = vmin.f32 %v1389, 1e+12
    %v1410 = vmin.f32 %v1390, 1e+12
    %v1411 = vmin.f32 %v1391, 1e+12
    %v1412 = vadd.f32 %v1115, %v1392
    %v1413 = vadd.f32 %v1116, %v1393
    %v1414 = vadd.f32 %v1117, %v1394
    %v1415 = vadd.f32 %v1118, %v1395
    %v1416 = vadd.f32 %v1119, %v1396
    %v1417 = vadd.f32 %v1120, %v1397
    %v1418 = vadd.f32 %v1121, %v1398
    %v1419 = vadd.f32 %v1122, %v1399
    %v1420 = vadd.f32 %v1123, %v1400
    %v1421 = vadd.f32 %v1124, %v1401
    %v1422 = vadd.f32 %v1125, %v1402
    %v1423 = vadd.f32 %v1126, %v1403
    %v1424 = vadd.f32 %v1127, %v1404
    %v1425 = vadd.f32 %v1128, %v1405
    %v1426 = vadd.f32 %v1129, %v1406
    %v1427 = vadd.f32 %v1130, %v1407
    %v1428 = vadd.f32 %v1131, %v1408
    %v1429 = vadd.f32 %v1132, %v1409
    %v1430 = vadd.f32 %v1133, %v1410
    %v1431 = vadd.f32 %v1134, %v1411
    %vm1432 = vcmp.eq.s32.totalorder %v80, 4
    %vm1433 = vcmp.eq.s32.totalorder %v81, 4
    %v1434 = vsel %vm1432, 1, 0
    %v1435 = vsel %vm1433, 1, 0
    %1436 = vset.pattern.permute.xlu0 0
    %1437 = vperm.xlu0 %1436, %v1434
    %v1438 = vpop.permute.xlu0 %1437
    %1439 = vset.pattern.permute.xlu0 0
    %1440 = vperm.xlu0 %1439, %v1435
    %v1441 = vpop.permute.xlu0 %1440
    %vm1442 = vcmp.eq.s32.totalorder %v1438, 1
    %vm1443 = vcmp.eq.s32.totalorder %v1441, 1
    %v1444 = vsel %vm1442, %v1392, %v1147
    %v1445 = vsel %vm1442, %v1393, %v1148
    %v1446 = vsel %vm1442, %v1394, %v1149
    %v1447 = vsel %vm1442, %v1395, %v1150
    %v1448 = vsel %vm1442, %v1396, %v1151
    %v1449 = vsel %vm1442, %v1397, %v1152
    %v1450 = vsel %vm1442, %v1398, %v1153
    %v1451 = vsel %vm1442, %v1399, %v1154
    %v1452 = vsel %vm1442, %v1400, %v1155
    %v1453 = vsel %vm1442, %v1401, %v1156
    %v1454 = vsel %vm1443, %v1402, %v1157
    %v1455 = vsel %vm1443, %v1403, %v1158
    %v1456 = vsel %vm1443, %v1404, %v1159
    %v1457 = vsel %vm1443, %v1405, %v1160
    %v1458 = vsel %vm1443, %v1406, %v1161
    %v1459 = vsel %vm1443, %v1407, %v1162
    %v1460 = vsel %vm1443, %v1408, %v1163
    %v1461 = vsel %vm1443, %v1409, %v1164
    %v1462 = vsel %vm1443, %v1410, %v1165
    %v1463 = vsel %vm1443, %v1411, %v1166
    %v1466 = vlaneseq
    %v1467 = vshrl.u32 %v1466, 7
    %v1468 = vsub.s32 0, %v1467
    %v1469 = vrot.slane %v1277, %v1468
    %v1470 = vlaneseq
    %v1471 = vshrl.u32 %v1470, 7
    %v1472 = vsub.s32 1, %v1471
    %v1473 = vrot.slane %v1277, %v1472
    %v1474 = vlaneseq
    %v1475 = vshrl.u32 %v1474, 7
    %v1476 = vsub.s32 2, %v1475
    %v1477 = vrot.slane %v1277, %v1476
    %v1478 = vlaneseq
    %v1479 = vshrl.u32 %v1478, 7
    %v1480 = vsub.s32 3, %v1479
    %v1481 = vrot.slane %v1277, %v1480
    %v1482 = vlaneseq
    %v1483 = vshrl.u32 %v1482, 7
    %v1484 = vsub.s32 4, %v1483
    %v1485 = vrot.slane %v1277, %v1484
    %v1486 = vlaneseq
    %v1487 = vshrl.u32 %v1486, 7
    %v1488 = vsub.s32 5, %v1487
    %v1489 = vrot.slane %v1277, %v1488
    %v1490 = vlaneseq
    %v1491 = vshrl.u32 %v1490, 7
    %v1492 = vsub.s32 6, %v1491
    %v1493 = vrot.slane %v1277, %v1492
    %v1494 = vlaneseq
    %v1495 = vshrl.u32 %v1494, 7
    %v1496 = vsub.s32 7, %v1495
    %v1497 = vrot.slane %v1277, %v1496
    %v1498 = vlaneseq
    %v1499 = vshrl.u32 %v1498, 7
    %v1500 = vsub.s32 0, %v1499
    %v1501 = vrot.slane %v1279, %v1500
    %v1502 = vlaneseq
    %v1503 = vshrl.u32 %v1502, 7
    %v1504 = vsub.s32 1, %v1503
    %v1505 = vrot.slane %v1279, %v1504
    %v1516 = vmul.f32 %v60, %v1469
    %v1517 = vmul.f32 %v61, %v1473
    %v1518 = vmul.f32 %v62, %v1477
    %v1519 = vmul.f32 %v63, %v1481
    %v1520 = vmul.f32 %v64, %v1485
    %v1521 = vmul.f32 %v65, %v1489
    %v1522 = vmul.f32 %v66, %v1493
    %v1523 = vmul.f32 %v67, %v1497
    %v1524 = vmul.f32 %v68, %v1501
    %v1525 = vmul.f32 %v69, %v1505
    %v1526 = vmul.f32 %v70, %v1469
    %v1527 = vmul.f32 %v71, %v1473
    %v1528 = vmul.f32 %v72, %v1477
    %v1529 = vmul.f32 %v73, %v1481
    %v1530 = vmul.f32 %v74, %v1485
    %v1531 = vmul.f32 %v75, %v1489
    %v1532 = vmul.f32 %v76, %v1493
    %v1533 = vmul.f32 %v77, %v1497
    %v1534 = vmul.f32 %v78, %v1501
    %v1535 = vmul.f32 %v79, %v1505
    %v1536 = vadd.f32 %v1516, %v1517
    %v1537 = vadd.f32 %v1536, %v1518
    %v1538 = vadd.f32 %v1537, %v1519
    %v1539 = vadd.f32 %v1538, %v1520
    %v1540 = vadd.f32 %v1539, %v1521
    %v1541 = vadd.f32 %v1540, %v1522
    %v1542 = vadd.f32 %v1541, %v1523
    %v1543 = vadd.f32 %v1542, %v1524
    %v1544 = vadd.f32 %v1543, %v1525
    %1545 = vadd.xlane.f32.xlu0 %v1544
    %v1546 = vpop.xlane.xlu0 %1545
    %v1547 = vadd.f32 %v1526, %v1527
    %v1548 = vadd.f32 %v1547, %v1528
    %v1549 = vadd.f32 %v1548, %v1529
    %v1550 = vadd.f32 %v1549, %v1530
    %v1551 = vadd.f32 %v1550, %v1531
    %v1552 = vadd.f32 %v1551, %v1532
    %v1553 = vadd.f32 %v1552, %v1533
    %v1554 = vadd.f32 %v1553, %v1534
    %v1555 = vadd.f32 %v1554, %v1535
    %1556 = vadd.xlane.f32.xlu0 %v1555
    %v1557 = vpop.xlane.xlu0 %1556
    %v1558 = vld [vmem:[%s3 + $0x4] sm:$0x1]
    %v1559 = vlaneseq
    %v1560 = vshrl.u32 %v1559, 7
    %v1561 = vsub.s32 0, %v1560
    %v1562 = vrot.slane %v1558, %v1561
    %v1563 = vadd.f32 %v1546, %v1562
    %v1564 = vadd.f32 %v1557, %v1562
    %s1565 = scalar_lea.vmem [#allocation4], 5
    %v1566 = vld [vmem:[%s1565] ss:$8 sm:$0xf]
    %v1567 = vld [vmem:[%s1565] ss:$8 sm:$0xf0]
    %v1568 = vor.u32 %v1566, %v1567
    %s1569 = scalar_lea.vmem [#allocation4], 69
    %v1570 = vld [vmem:[%s1569] ss:$8 sm:$0x3]
    %s1571 = scalar_lea.vmem [#allocation6], 5
    %v1572 = vld [vmem:[%s1571] ss:$8 sm:$0xf]
    %v1573 = vld [vmem:[%s1571] ss:$8 sm:$0xf0]
    %v1574 = vor.u32 %v1572, %v1573
    %s1575 = scalar_lea.vmem [#allocation6], 69
    %v1576 = vld [vmem:[%s1575] ss:$8 sm:$0x3]
    %v1579 = vlaneseq
    %v1580 = vshrl.u32 %v1579, 7
    %v1581 = vsub.s32 0, %v1580
    %v1582 = vrot.slane %v1568, %v1581
    %v1583 = vlaneseq
    %v1584 = vshrl.u32 %v1583, 7
    %v1585 = vsub.s32 1, %v1584
    %v1586 = vrot.slane %v1568, %v1585
    %v1587 = vlaneseq
    %v1588 = vshrl.u32 %v1587, 7
    %v1589 = vsub.s32 2, %v1588
    %v1590 = vrot.slane %v1568, %v1589
    %v1591 = vlaneseq
    %v1592 = vshrl.u32 %v1591, 7
    %v1593 = vsub.s32 3, %v1592
    %v1594 = vrot.slane %v1568, %v1593
    %v1595 = vlaneseq
    %v1596 = vshrl.u32 %v1595, 7
    %v1597 = vsub.s32 4, %v1596
    %v1598 = vrot.slane %v1568, %v1597
    %v1599 = vlaneseq
    %v1600 = vshrl.u32 %v1599, 7
    %v1601 = vsub.s32 5, %v1600
    %v1602 = vrot.slane %v1568, %v1601
    %v1603 = vlaneseq
    %v1604 = vshrl.u32 %v1603, 7
    %v1605 = vsub.s32 6, %v1604
    %v1606 = vrot.slane %v1568, %v1605
    %v1607 = vlaneseq
    %v1608 = vshrl.u32 %v1607, 7
    %v1609 = vsub.s32 7, %v1608
    %v1610 = vrot.slane %v1568, %v1609
    %v1611 = vlaneseq
    %v1612 = vshrl.u32 %v1611, 7
    %v1613 = vsub.s32 0, %v1612
    %v1614 = vrot.slane %v1570, %v1613
    %v1615 = vlaneseq
    %v1616 = vshrl.u32 %v1615, 7
    %v1617 = vsub.s32 1, %v1616
    %v1618 = vrot.slane %v1570, %v1617
    %v1629 = vsub.f32 %v60, %v1582
    %v1630 = vsub.f32 %v61, %v1586
    %v1631 = vsub.f32 %v62, %v1590
    %v1632 = vsub.f32 %v63, %v1594
    %v1633 = vsub.f32 %v64, %v1598
    %v1634 = vsub.f32 %v65, %v1602
    %v1635 = vsub.f32 %v66, %v1606
    %v1636 = vsub.f32 %v67, %v1610
    %v1637 = vsub.f32 %v68, %v1614
    %v1638 = vsub.f32 %v69, %v1618
    %v1639 = vsub.f32 %v70, %v1582
    %v1640 = vsub.f32 %v71, %v1586
    %v1641 = vsub.f32 %v72, %v1590
    %v1642 = vsub.f32 %v73, %v1594
    %v1643 = vsub.f32 %v74, %v1598
    %v1644 = vsub.f32 %v75, %v1602
    %v1645 = vsub.f32 %v76, %v1606
    %v1646 = vsub.f32 %v77, %v1610
    %v1647 = vsub.f32 %v78, %v1614
    %v1648 = vsub.f32 %v79, %v1618
    %v1649 = vmul.f32 %v1629, %v1629
    %v1650 = vmul.f32 %v1630, %v1630
    %v1651 = vmul.f32 %v1631, %v1631
    %v1652 = vmul.f32 %v1632, %v1632
    %v1653 = vmul.f32 %v1633, %v1633
    %v1654 = vmul.f32 %v1634, %v1634
    %v1655 = vmul.f32 %v1635, %v1635
    %v1656 = vmul.f32 %v1636, %v1636
    %v1657 = vmul.f32 %v1637, %v1637
    %v1658 = vmul.f32 %v1638, %v1638
    %v1659 = vmul.f32 %v1639, %v1639
    %v1660 = vmul.f32 %v1640, %v1640
    %v1661 = vmul.f32 %v1641, %v1641
    %v1662 = vmul.f32 %v1642, %v1642
    %v1663 = vmul.f32 %v1643, %v1643
    %v1664 = vmul.f32 %v1644, %v1644
    %v1665 = vmul.f32 %v1645, %v1645
    %v1666 = vmul.f32 %v1646, %v1646
    %v1667 = vmul.f32 %v1647, %v1647
    %v1668 = vmul.f32 %v1648, %v1648
    %v1669 = vmax.f32 %v1649, 1e-12
    %v1670 = vmax.f32 %v1650, 1e-12
    %v1671 = vmax.f32 %v1651, 1e-12
    %v1672 = vmax.f32 %v1652, 1e-12
    %v1673 = vmax.f32 %v1653, 1e-12
    %v1674 = vmax.f32 %v1654, 1e-12
    %v1675 = vmax.f32 %v1655, 1e-12
    %v1676 = vmax.f32 %v1656, 1e-12
    %v1677 = vmax.f32 %v1657, 1e-12
    %v1678 = vmax.f32 %v1658, 1e-12
    %v1679 = vmax.f32 %v1659, 1e-12
    %v1680 = vmax.f32 %v1660, 1e-12
    %v1681 = vmax.f32 %v1661, 1e-12
    %v1682 = vmax.f32 %v1662, 1e-12
    %v1683 = vmax.f32 %v1663, 1e-12
    %v1684 = vmax.f32 %v1664, 1e-12
    %v1685 = vmax.f32 %v1665, 1e-12
    %v1686 = vmax.f32 %v1666, 1e-12
    %v1687 = vmax.f32 %v1667, 1e-12
    %v1688 = vmax.f32 %v1668, 1e-12
    %v1689 = vmin.f32 %v1669, 1e+12
    %v1690 = vmin.f32 %v1670, 1e+12
    %v1691 = vmin.f32 %v1671, 1e+12
    %v1692 = vmin.f32 %v1672, 1e+12
    %v1693 = vmin.f32 %v1673, 1e+12
    %v1694 = vmin.f32 %v1674, 1e+12
    %v1695 = vmin.f32 %v1675, 1e+12
    %v1696 = vmin.f32 %v1676, 1e+12
    %v1697 = vmin.f32 %v1677, 1e+12
    %v1698 = vmin.f32 %v1678, 1e+12
    %v1699 = vmin.f32 %v1679, 1e+12
    %v1700 = vmin.f32 %v1680, 1e+12
    %v1701 = vmin.f32 %v1681, 1e+12
    %v1702 = vmin.f32 %v1682, 1e+12
    %v1703 = vmin.f32 %v1683, 1e+12
    %v1704 = vmin.f32 %v1684, 1e+12
    %v1705 = vmin.f32 %v1685, 1e+12
    %v1706 = vmin.f32 %v1686, 1e+12
    %v1707 = vmin.f32 %v1687, 1e+12
    %v1708 = vmin.f32 %v1688, 1e+12
    %v1709 = vadd.f32 %v1412, %v1689
    %v1710 = vadd.f32 %v1413, %v1690
    %v1711 = vadd.f32 %v1414, %v1691
    %v1712 = vadd.f32 %v1415, %v1692
    %v1713 = vadd.f32 %v1416, %v1693
    %v1714 = vadd.f32 %v1417, %v1694
    %v1715 = vadd.f32 %v1418, %v1695
    %v1716 = vadd.f32 %v1419, %v1696
    %v1717 = vadd.f32 %v1420, %v1697
    %v1718 = vadd.f32 %v1421, %v1698
    %v1719 = vadd.f32 %v1422, %v1699
    %v1720 = vadd.f32 %v1423, %v1700
    %v1721 = vadd.f32 %v1424, %v1701
    %v1722 = vadd.f32 %v1425, %v1702
    %v1723 = vadd.f32 %v1426, %v1703
    %v1724 = vadd.f32 %v1427, %v1704
    %v1725 = vadd.f32 %v1428, %v1705
    %v1726 = vadd.f32 %v1429, %v1706
    %v1727 = vadd.f32 %v1430, %v1707
    %v1728 = vadd.f32 %v1431, %v1708
    %vm1729 = vcmp.eq.s32.totalorder %v80, 5
    %vm1730 = vcmp.eq.s32.totalorder %v81, 5
    %v1731 = vsel %vm1729, 1, 0
    %v1732 = vsel %vm1730, 1, 0
    %1733 = vset.pattern.permute.xlu0 0
    %1734 = vperm.xlu0 %1733, %v1731
    %v1735 = vpop.permute.xlu0 %1734
    %1736 = vset.pattern.permute.xlu0 0
    %1737 = vperm.xlu0 %1736, %v1732
    %v1738 = vpop.permute.xlu0 %1737
    %vm1739 = vcmp.eq.s32.totalorder %v1735, 1
    %vm1740 = vcmp.eq.s32.totalorder %v1738, 1
    %v1741 = vsel %vm1739, %v1689, %v1444
    %v1742 = vsel %vm1739, %v1690, %v1445
    %v1743 = vsel %vm1739, %v1691, %v1446
    %v1744 = vsel %vm1739, %v1692, %v1447
    %v1745 = vsel %vm1739, %v1693, %v1448
    %v1746 = vsel %vm1739, %v1694, %v1449
    %v1747 = vsel %vm1739, %v1695, %v1450
    %v1748 = vsel %vm1739, %v1696, %v1451
    %v1749 = vsel %vm1739, %v1697, %v1452
    %v1750 = vsel %vm1739, %v1698, %v1453
    %v1751 = vsel %vm1740, %v1699, %v1454
    %v1752 = vsel %vm1740, %v1700, %v1455
    %v1753 = vsel %vm1740, %v1701, %v1456
    %v1754 = vsel %vm1740, %v1702, %v1457
    %v1755 = vsel %vm1740, %v1703, %v1458
    %v1756 = vsel %vm1740, %v1704, %v1459
    %v1757 = vsel %vm1740, %v1705, %v1460
    %v1758 = vsel %vm1740, %v1706, %v1461
    %v1759 = vsel %vm1740, %v1707, %v1462
    %v1760 = vsel %vm1740, %v1708, %v1463
    %v1763 = vlaneseq
    %v1764 = vshrl.u32 %v1763, 7
    %v1765 = vsub.s32 0, %v1764
    %v1766 = vrot.slane %v1574, %v1765
    %v1767 = vlaneseq
    %v1768 = vshrl.u32 %v1767, 7
    %v1769 = vsub.s32 1, %v1768
    %v1770 = vrot.slane %v1574, %v1769
    %v1771 = vlaneseq
    %v1772 = vshrl.u32 %v1771, 7
    %v1773 = vsub.s32 2, %v1772
    %v1774 = vrot.slane %v1574, %v1773
    %v1775 = vlaneseq
    %v1776 = vshrl.u32 %v1775, 7
    %v1777 = vsub.s32 3, %v1776
    %v1778 = vrot.slane %v1574, %v1777
    %v1779 = vlaneseq
    %v1780 = vshrl.u32 %v1779, 7
    %v1781 = vsub.s32 4, %v1780
    %v1782 = vrot.slane %v1574, %v1781
    %v1783 = vlaneseq
    %v1784 = vshrl.u32 %v1783, 7
    %v1785 = vsub.s32 5, %v1784
    %v1786 = vrot.slane %v1574, %v1785
    %v1787 = vlaneseq
    %v1788 = vshrl.u32 %v1787, 7
    %v1789 = vsub.s32 6, %v1788
    %v1790 = vrot.slane %v1574, %v1789
    %v1791 = vlaneseq
    %v1792 = vshrl.u32 %v1791, 7
    %v1793 = vsub.s32 7, %v1792
    %v1794 = vrot.slane %v1574, %v1793
    %v1795 = vlaneseq
    %v1796 = vshrl.u32 %v1795, 7
    %v1797 = vsub.s32 0, %v1796
    %v1798 = vrot.slane %v1576, %v1797
    %v1799 = vlaneseq
    %v1800 = vshrl.u32 %v1799, 7
    %v1801 = vsub.s32 1, %v1800
    %v1802 = vrot.slane %v1576, %v1801
    %v1813 = vmul.f32 %v60, %v1766
    %v1814 = vmul.f32 %v61, %v1770
    %v1815 = vmul.f32 %v62, %v1774
    %v1816 = vmul.f32 %v63, %v1778
    %v1817 = vmul.f32 %v64, %v1782
    %v1818 = vmul.f32 %v65, %v1786
    %v1819 = vmul.f32 %v66, %v1790
    %v1820 = vmul.f32 %v67, %v1794
    %v1821 = vmul.f32 %v68, %v1798
    %v1822 = vmul.f32 %v69, %v1802
    %v1823 = vmul.f32 %v70, %v1766
    %v1824 = vmul.f32 %v71, %v1770
    %v1825 = vmul.f32 %v72, %v1774
    %v1826 = vmul.f32 %v73, %v1778
    %v1827 = vmul.f32 %v74, %v1782
    %v1828 = vmul.f32 %v75, %v1786
    %v1829 = vmul.f32 %v76, %v1790
    %v1830 = vmul.f32 %v77, %v1794
    %v1831 = vmul.f32 %v78, %v1798
    %v1832 = vmul.f32 %v79, %v1802
    %v1833 = vadd.f32 %v1813, %v1814
    %v1834 = vadd.f32 %v1833, %v1815
    %v1835 = vadd.f32 %v1834, %v1816
    %v1836 = vadd.f32 %v1835, %v1817
    %v1837 = vadd.f32 %v1836, %v1818
    %v1838 = vadd.f32 %v1837, %v1819
    %v1839 = vadd.f32 %v1838, %v1820
    %v1840 = vadd.f32 %v1839, %v1821
    %v1841 = vadd.f32 %v1840, %v1822
    %1842 = vadd.xlane.f32.xlu0 %v1841
    %v1843 = vpop.xlane.xlu0 %1842
    %v1844 = vadd.f32 %v1823, %v1824
    %v1845 = vadd.f32 %v1844, %v1825
    %v1846 = vadd.f32 %v1845, %v1826
    %v1847 = vadd.f32 %v1846, %v1827
    %v1848 = vadd.f32 %v1847, %v1828
    %v1849 = vadd.f32 %v1848, %v1829
    %v1850 = vadd.f32 %v1849, %v1830
    %v1851 = vadd.f32 %v1850, %v1831
    %v1852 = vadd.f32 %v1851, %v1832
    %1853 = vadd.xlane.f32.xlu0 %v1852
    %v1854 = vpop.xlane.xlu0 %1853
    %v1855 = vld [vmem:[%s3 + $0x5] sm:$0x1]
    %v1856 = vlaneseq
    %v1857 = vshrl.u32 %v1856, 7
    %v1858 = vsub.s32 0, %v1857
    %v1859 = vrot.slane %v1855, %v1858
    %v1860 = vadd.f32 %v1843, %v1859
    %v1861 = vadd.f32 %v1854, %v1859
    %v1862 = vmax.f32 %v375, %v672
    %v1863 = vmax.f32 %v376, %v673
    %v1864 = vmax.f32 %v1862, %v969
    %v1865 = vmax.f32 %v1863, %v970
    %v1866 = vmax.f32 %v1864, %v1266
    %v1867 = vmax.f32 %v1865, %v1267
    %v1868 = vmax.f32 %v1866, %v1563
    %v1869 = vmax.f32 %v1867, %v1564
    %v1870 = vmax.f32 %v1868, %v1860
    %v1871 = vmax.f32 %v1869, %v1861
    %v1872 = vsub.f32 %v375, %v1870
    %v1873 = vsub.f32 %v376, %v1871
    %v1874 = vmul.f32 %v1872, 1.442695
    %v1875 = vpow.pop %v1874
    %v1876 = vmul.f32 %v1873, 1.442695
    %v1877 = vpow.pop %v1876
    %v1878 = vadd.f32 %v1875, 0.0
    %v1879 = vadd.f32 %v1877, 0.0
    %v1880 = vsel %vm244, %v375, 0.0
    %v1881 = vsel %vm245, %v376, 0.0
    %v1882 = vsub.f32 %v672, %v1870
    %v1883 = vsub.f32 %v673, %v1871
    %v1884 = vmul.f32 %v1882, 1.442695
    %v1885 = vpow.pop %v1884
    %v1886 = vmul.f32 %v1883, 1.442695
    %v1887 = vpow.pop %v1886
    %v1888 = vadd.f32 %v1878, %v1885
    %v1889 = vadd.f32 %v1879, %v1887
    %v1890 = vsel %vm541, %v672, %v1880
    %v1891 = vsel %vm542, %v673, %v1881
    %v1892 = vsub.f32 %v969, %v1870
    %v1893 = vsub.f32 %v970, %v1871
    %v1894 = vmul.f32 %v1892, 1.442695
    %v1895 = vpow.pop %v1894
    %v1896 = vmul.f32 %v1893, 1.442695
    %v1897 = vpow.pop %v1896
    %v1898 = vadd.f32 %v1888, %v1895
    %v1899 = vadd.f32 %v1889, %v1897
    %v1900 = vsel %vm838, %v969, %v1890
    %v1901 = vsel %vm839, %v970, %v1891
    %v1902 = vsub.f32 %v1266, %v1870
    %v1903 = vsub.f32 %v1267, %v1871
    %v1904 = vmul.f32 %v1902, 1.442695
    %v1905 = vpow.pop %v1904
    %v1906 = vmul.f32 %v1903, 1.442695
    %v1907 = vpow.pop %v1906
    %v1908 = vadd.f32 %v1898, %v1905
    %v1909 = vadd.f32 %v1899, %v1907
    %v1910 = vsel %vm1135, %v1266, %v1900
    %v1911 = vsel %vm1136, %v1267, %v1901
    %v1912 = vsub.f32 %v1563, %v1870
    %v1913 = vsub.f32 %v1564, %v1871
    %v1914 = vmul.f32 %v1912, 1.442695
    %v1915 = vpow.pop %v1914
    %v1916 = vmul.f32 %v1913, 1.442695
    %v1917 = vpow.pop %v1916
    %v1918 = vadd.f32 %v1908, %v1915
    %v1919 = vadd.f32 %v1909, %v1917
    %v1920 = vsel %vm1432, %v1563, %v1910
    %v1921 = vsel %vm1433, %v1564, %v1911
    %v1922 = vsub.f32 %v1860, %v1870
    %v1923 = vsub.f32 %v1861, %v1871
    %v1924 = vmul.f32 %v1922, 1.442695
    %v1925 = vpow.pop %v1924
    %v1926 = vmul.f32 %v1923, 1.442695
    %v1927 = vpow.pop %v1926
    %v1928 = vadd.f32 %v1918, %v1925
    %v1929 = vadd.f32 %v1919, %v1927
    %v1930 = vsel %vm1729, %v1860, %v1920
    %v1931 = vsel %vm1730, %v1861, %v1921
    %v1932 = vlog2.pop %v1928
    %v1933 = vmul.f32 %v1932, 0.6931472
    %v1934 = vlog2.pop %v1929
    %v1935 = vmul.f32 %v1934, 0.6931472
    %v1936 = vadd.f32 %v1870, %v1933
    %v1937 = vadd.f32 %v1871, %v1935
    %v1938 = vsub.f32 %v1936, %v1930
    %v1939 = vsub.f32 %v1937, %v1931
    %vm1940 = vcmask 7168
    %1941 = vst.msk [vmem:[%s5] sm:$0xff] %vm1940, %v1938
    %1942 = vst.msk [vmem:[%s5 + $0x8] sm:$0xff] %vm1940, %v1939
    %v1943 = vadd.f32 %v1741, %v1742
    %v1944 = vadd.f32 %v1943, %v1743
    %v1945 = vadd.f32 %v1944, %v1744
    %v1946 = vadd.f32 %v1945, %v1745
    %v1947 = vadd.f32 %v1946, %v1746
    %v1948 = vadd.f32 %v1947, %v1747
    %v1949 = vadd.f32 %v1948, %v1748
    %v1950 = vadd.f32 %v1949, %v1749
    %v1951 = vadd.f32 %v1950, %v1750
    %1952 = vadd.xlane.f32.xlu0 %v1951
    %v1953 = vpop.xlane.xlu0 %1952
    %v1954 = vadd.f32 %v1751, %v1752
    %v1955 = vadd.f32 %v1954, %v1753
    %v1956 = vadd.f32 %v1955, %v1754
    %v1957 = vadd.f32 %v1956, %v1755
    %v1958 = vadd.f32 %v1957, %v1756
    %v1959 = vadd.f32 %v1958, %v1757
    %v1960 = vadd.f32 %v1959, %v1758
    %v1961 = vadd.f32 %v1960, %v1759
    %v1962 = vadd.f32 %v1961, %v1760
    %1963 = vadd.xlane.f32.xlu0 %v1962
    %v1964 = vpop.xlane.xlu0 %1963
    %v1965 = vadd.f32 %v1709, %v1710
    %v1966 = vadd.f32 %v1965, %v1711
    %v1967 = vadd.f32 %v1966, %v1712
    %v1968 = vadd.f32 %v1967, %v1713
    %v1969 = vadd.f32 %v1968, %v1714
    %v1970 = vadd.f32 %v1969, %v1715
    %v1971 = vadd.f32 %v1970, %v1716
    %v1972 = vadd.f32 %v1971, %v1717
    %v1973 = vadd.f32 %v1972, %v1718
    %1974 = vadd.xlane.f32.xlu0 %v1973
    %v1975 = vpop.xlane.xlu0 %1974
    %v1976 = vadd.f32 %v1719, %v1720
    %v1977 = vadd.f32 %v1976, %v1721
    %v1978 = vadd.f32 %v1977, %v1722
    %v1979 = vadd.f32 %v1978, %v1723
    %v1980 = vadd.f32 %v1979, %v1724
    %v1981 = vadd.f32 %v1980, %v1725
    %v1982 = vadd.f32 %v1981, %v1726
    %v1983 = vadd.f32 %v1982, %v1727
    %v1984 = vadd.f32 %v1983, %v1728
    %1985 = vadd.xlane.f32.xlu0 %v1984
    %v1986 = vpop.xlane.xlu0 %1985
    %v1987 = vadd.f32 %v1953, 6.4e-09
    %v1988 = vadd.f32 %v1964, 6.4e-09
    %v1989 = vmul.f32 %v1987, 0.00013020834
    %v1990 = vmul.f32 %v1988, 0.00013020834
    %1991 = vst.msk [vmem:[%s6] sm:$0xff] %vm1940, %v1989
    %1992 = vst.msk [vmem:[%s6 + $0x8] sm:$0xff] %vm1940, %v1990
    %v1993 = vsub.f32 %v1975, %v1953
    %v1994 = vsub.f32 %v1986, %v1964
    %v1995 = vadd.f32 %v1993, 1.28e-09
    %v1996 = vadd.f32 %v1994, 1.28e-09
    %v1997 = vmul.f32 %v1995, 0.00013020834
    %v1998 = vmul.f32 %v1996, 0.00013020834
    %1999 = vst.msk [vmem:[%s7] sm:$0xff] %vm1940, %v1997
    %2000 = vst.msk [vmem:[%s7 + $0x8] sm:$0xff] %vm1940, %v1998
    // Predicated region
    $region34: #{tpu_custom_call.1} parent=1 // pred_check
      _
    $region35: #{tpu_custom_call.1} parent=1 // pred_check_branch
      %2002 = sbr.rel (0) target = $region37
    $region36: #{tpu_custom_call.1} parent=1 // pred_region
      _
    $region37: #{tpu_custom_call.1} parent=1 // pred_fallthru
      _
    // Predicated region
    $region38: #{tpu_custom_call.1} parent=1 // pred_check
      _
    $region39: #{tpu_custom_call.1} parent=1 // pred_check_branch
      %2004 = sbr.rel (0) target = $region41
    $region40: #{tpu_custom_call.1} parent=1 // pred_region
      _
    $region41: #{tpu_custom_call.1} parent=1 // pred_fallthru
      _
    // Predicated region
    $region42: #{tpu_custom_call.1} parent=1 // pred_check
      _
    $region43: #{tpu_custom_call.1} parent=1 // pred_check_branch
      %2006 = sbr.rel (0) target = $region45
    $region44: #{tpu_custom_call.1} parent=1 // pred_region
      _
    $region45: #{tpu_custom_call.1} parent=1 // pred_fallthru
      _
    // Predicated region
    $region46: #{tpu_custom_call.1} parent=1 // pred_check
      _
    $region47: #{tpu_custom_call.1} parent=1 // pred_check_branch
      %2008 = sbr.rel (0) target = $region49
    $region48: #{tpu_custom_call.1} parent=1 // pred_region
      _
    $region49: #{tpu_custom_call.1} parent=1 // pred_fallthru
      _
    // Predicated region
    $region50: #{tpu_custom_call.1} parent=1 // pred_check
      _
    $region51: #{tpu_custom_call.1} parent=1 // pred_check_branch
      %2010 = sbr.rel (0) target = $region53
    $region52: #{tpu_custom_call.1} parent=1 // pred_region
      _
    $region53: #{tpu_custom_call.1} parent=1 // pred_fallthru
      _
    // Predicated region
    $region54: #{tpu_custom_call.1} parent=1 // pred_check
      _
    $region55: #{tpu_custom_call.1} parent=1 // pred_check_branch
      %2012 = sbr.rel (0) target = $region57
    $region56: #{tpu_custom_call.1} parent=1 // pred_region
      _
    $region57: #{tpu_custom_call.1} parent=1 // pred_fallthru
      _
    %2013 = vsyncpa [#allocation3], 1
    %2014 = vsyncpa [#allocation5], 1

</llo_original>
